<compile_context>
chip_gen: v5e
topology: v5e:2x2
jax: 0.10.0
libtpu: 0.0.40
codegen_flags: <defaults>
</compile_context>

<pallas_src>
import functools

import jax
import jax.numpy as jnp
from jax.experimental import pallas as pl
from jax.experimental.pallas import tpu as pltpu

# Module hyper-parameters hard-coded by the PyTorch __init__.
GAME_SIZE = 2
EMBED_SIZE = 30
HIDDEN_SIZE = 80

_LANES = 128
_SUBLANES = 8


def _round_up(x, m):
    return ((x + m - 1) // m) * m


E_PAD = _round_up(EMBED_SIZE, _SUBLANES)          # 32

# Packed weight-slab row offsets (all multiples of 8 -> aligned sublane views).
_W1_ROW = 0                                        # rows [ 0,32): lin1.weight (E,F)
_W2_ROW = _W1_ROW + E_PAD                          # rows [32,40): conv2 as (G,H) rows
_W3_ROW = _W2_ROW + _SUBLANES                      # rows [40,48): conv3 as (1,H) row
_W4_ROW = _W3_ROW + _SUBLANES                      # rows [48,80): lin4.weight^T / temp
_SLAB_ROWS = _W4_ROW + E_PAD                       # 80


def _informed_sender_kernel(x_ref, w_ref, out_ref, *, feat_size, vocab_size,
                            batch_tile):
    # x_ref  : (batch_tile, G, F)  raw (unpadded) input features for this block
    # w_ref  : (_SLAB_ROWS, 128)   packed, zero-padded weight slab (VMEM-resident)
    # out_ref: (batch_tile, 128)   log-softmax over the first `vocab_size` lanes
    F = feat_size

    # Weight views, hoisted out of the per-game loop.
    w1 = w_ref[_W1_ROW:_W1_ROW + E_PAD, 0:F]            # (32, F)   lin1.weight
    w2r0 = w_ref[_W2_ROW:_W2_ROW + 1, :]                 # (1, 128)  conv2, g = 0
    w2r1 = w_ref[_W2_ROW + 1:_W2_ROW + 2, :]             # (1, 128)  conv2, g = 1
    w3 = w_ref[_W3_ROW:_W3_ROW + 1, :]                   # (1, 128)  conv3
    lane = jax.lax.broadcasted_iota(jnp.int32, (1, _LANES), 1)
    neg = jnp.float32(-1e30)

    # Static unroll over the games of this block; each chain is independent so
    # the scheduler overlaps them, amortizing the per-step pipeline overhead.
    for b in range(batch_tile):
        xb = x_ref[b]                                                # (G, F)

        # lin1 for the two game items: VPU broadcast-mul + cross-lane reduce.
        emb0 = jnp.sum(w1 * xb[0:1, :], axis=1, keepdims=True)       # (32, 1)
        emb1 = jnp.sum(w1 * xb[1:2, :], axis=1, keepdims=True)       # (32, 1)

        # conv2 ((G,1) kernel & stride): two rank-1 broadcast products, stored
        # transposed as h2t[e, h].
        h2t = jax.nn.sigmoid(emb0 * w2r0 + emb1 * w2r1)              # (32, 128)

        # conv3 ((H,1) kernel & stride): mul + cross-lane reduce.  Padded lanes
        # (sigmoid(0)=0.5) are annihilated by the zero-padded w3 / w4 entries.
        h3 = jax.nn.sigmoid(
            jnp.sum(h2t * w3, axis=1, keepdims=True))                # (32, 1)

        # lin4 (1/temp already folded into the slab): mul + cross-sublane
        # reduce, producing a lane-dense (1, 128) logits row.
        w4t = w_ref[_W4_ROW:_W4_ROW + E_PAD, :]                      # (32, 128)
        logits = jnp.sum(h3 * w4t, axis=0, keepdims=True)            # (1, 128)

        # Masked log-softmax over the real vocab lanes.
        logits = jnp.where(lane < vocab_size, logits, neg)
        m = jnp.max(logits, axis=1, keepdims=True)
        z = logits - m
        lse = jnp.log(jnp.sum(jnp.exp(z), axis=1, keepdims=True))
        out_ref[b:b + 1, :] = z - lse


def prepare_informed_sender_params(w1, w2, w3, w4, temp=1.0):
    """One-time packing of the PyTorch-layout weights into a (80, 128) slab.

    w1: (E, F) lin1.weight          w2: (H, 1, G, 1) conv2.weight
    w3: (1, 1, H, 1) conv3.weight   w4: (V, E) lin4.weight
    The temperature is folded into w4 (logits are linear in w4).
    """
    E, F = w1.shape
    H = w2.shape[0]
    G = w2.shape[2]
    V = w4.shape[0]
    assert E == EMBED_SIZE and H == HIDDEN_SIZE and G == GAME_SIZE
    assert F <= _LANES and H <= _LANES and V <= _LANES

    slab = jnp.zeros((_SLAB_ROWS, _LANES), jnp.float32)
    slab = slab.at[_W1_ROW:_W1_ROW + E, :F].set(jnp.asarray(w1, jnp.float32))
    slab = slab.at[_W2_ROW:_W2_ROW + G, :H].set(
        jnp.asarray(w2, jnp.float32).reshape(H, G).T)
    slab = slab.at[_W3_ROW, :H].set(jnp.asarray(w3, jnp.float32).reshape(H))
    slab = slab.at[_W4_ROW:_W4_ROW + E, :V].set(
        jnp.asarray(w4, jnp.float32).T / jnp.float32(temp))
    return slab


@functools.partial(jax.jit, static_argnames=("vocab_size", "batch_tile"))
def informed_sender_forward(x, w_slab, *, vocab_size, batch_tile=8):
    """Batched forward: x is (B, game_size, feat_size) -> (B, vocab_size)."""
    x = jnp.asarray(x, jnp.float32)
    B, G, F = x.shape
    assert G == GAME_SIZE

    # Pad the batch to a multiple of the per-step tile; pad games are sliced off.
    b_pad = _round_up(max(B, 1), batch_tile)
    if b_pad != B:
        x = jnp.concatenate(
            [x, jnp.zeros((b_pad - B, G, F), jnp.float32)], axis=0)

    kernel = functools.partial(_informed_sender_kernel, feat_size=F,
                               vocab_size=vocab_size, batch_tile=batch_tile)

    flops_per_game = 2 * (G * F * EMBED_SIZE + G * EMBED_SIZE * HIDDEN_SIZE
                          + EMBED_SIZE * HIDDEN_SIZE + EMBED_SIZE * vocab_size)
    transc_per_game = E_PAD * _LANES + E_PAD + 2 * _LANES
    cost = pl.CostEstimate(
        flops=b_pad * flops_per_game,
        transcendentals=b_pad * transc_per_game,
        bytes_accessed=(x.size + _SLAB_ROWS * _LANES + b_pad * _LANES) * 4)

    out_pad = pl.pallas_call(
        kernel,
        out_shape=jax.ShapeDtypeStruct((b_pad, _LANES), jnp.float32),
        grid=(b_pad // batch_tile,),
        in_specs=[
            # x: blocked along the batch axis (double-buffered per step).
            pl.BlockSpec((batch_tile, G, F), lambda i: (i, 0, 0)),
            # Packed weight slab: constant index_map -> DMA'd once, stays
            # resident in VMEM across the whole grid.
            pl.BlockSpec((_SLAB_ROWS, _LANES), lambda i: (0, 0)),
        ],
        out_specs=pl.BlockSpec((batch_tile, _LANES), lambda i: (i, 0)),
        compiler_params=pltpu.CompilerParams(
            dimension_semantics=("parallel",)),
        cost_estimate=cost,
    )(x, w_slab)

    return out_pad[:B, :vocab_size]


def _reference_forward(x, w1, w2, w3, w4, temp=1.0):
    """Pure-JAX reference mirroring the PyTorch forward, batched over games."""
    H = w2.shape[0]
    G = x.shape[1]
    hp = jax.lax.Precision.HIGHEST
    emb = jnp.einsum('bgf,ef->bge', x, w1, precision=hp)                  # (B,G,E)
    h2 = jax.nn.sigmoid(
        jnp.einsum('hg,bge->bhe', w2.reshape(H, G), emb, precision=hp))   # (B,H,E)
    h3 = jax.nn.sigmoid(
        jnp.einsum('h,bhe->be', w3.reshape(H), h2, precision=hp))         # (B,E)
    logits = jnp.einsum('be,ve->bv', h3, w4, precision=hp) / temp         # (B,V)
    return jax.nn.log_softmax(logits, axis=1)


if __name__ == "__main__":
    feat_size = 16
    vocab_size = 100
    temp = 1.0
    batch = 16          # independent games (forward passes) per batched call

    key = jax.random.PRNGKey(0)
    k_x, k1, k2, k3, k4 = jax.random.split(key, 5)

    # One game = game_size feature vectors; batch of games -> (B, G, F).
    x = jax.random.normal(k_x, (batch, GAME_SIZE, feat_size), dtype=jnp.float32)

    def uni(k, shape, fan_in):
        b = 1.0 / jnp.sqrt(fan_in)
        return jax.random.uniform(k, shape, jnp.float32, -b, b)

    w1 = uni(k1, (EMBED_SIZE, feat_size), feat_size)              # lin1.weight
    w2 = uni(k2, (HIDDEN_SIZE, 1, GAME_SIZE, 1), GAME_SIZE)       # conv2.weight
    w3 = uni(k3, (1, 1, HIDDEN_SIZE, 1), HIDDEN_SIZE)             # conv3.weight
    w4 = uni(k4, (vocab_size, EMBED_SIZE), EMBED_SIZE)            # lin4.weight

    # One-time weight packing (hoisted out of the per-call path).
    w_slab = prepare_informed_sender_params(w1, w2, w3, w4, temp=temp)

    out = informed_sender_forward(x, w_slab, vocab_size=vocab_size)
    out = jax.block_until_ready(out)

    ref = _reference_forward(x, w1, w2, w3, w4, temp=temp)
    assert out.shape == (batch, vocab_size)
    assert bool(jnp.all(jnp.isfinite(out)))
    assert bool(jnp.allclose(out, ref, atol=1e-4, rtol=1e-4))
    # log_softmax sanity: probabilities sum to 1 for every game.
    assert bool(jnp.allclose(jnp.sum(jnp.exp(out), axis=1), 1.0, atol=1e-5))

    print("KERNEL_OK")
</pallas_src>

<mosaic_0001>
module attributes {stable_mosaic.version = 11 : i64} {
  func.func @_informed_sender_kernel(%arg0: i32, %arg1: memref<8x2x16xf32, #tpu.memory_space<vmem>>, %arg2: memref<80x128xf32, #tpu.memory_space<vmem>>, %arg3: memref<8x128xf32, #tpu.memory_space<vmem>>) attributes {dimension_semantics = [#tpu.dimension_semantics<parallel>], iteration_bounds = array<i64: 2>, scalar_prefetch = 0 : i64, scratch_operands = 0 : i64, tpu.core_type = #tpu.core_type<tc>, window_params = [{transform_indices = @transform_0, window_bounds = array<i64: 8, 2, 16>}, {pipeline_mode = #tpu.pipeline_mode<synchronous>, transform_indices = @transform_1, window_bounds = array<i64: 80, 128>}, {transform_indices = @transform_2, window_bounds = array<i64: 8, 128>}]} {
    %c0 = arith.constant 0 : index
    %c0_0 = arith.constant 0 : index
    %0 = vector.load %arg2[%c0, %c0_0] : memref<80x128xf32, #tpu.memory_space<vmem>>, vector<32x16xf32>
    %c32 = arith.constant 32 : index
    %c0_1 = arith.constant 0 : index
    %1 = vector.load %arg2[%c32, %c0_1] : memref<80x128xf32, #tpu.memory_space<vmem>>, vector<1x128xf32>
    %c33 = arith.constant 33 : index
    %c0_2 = arith.constant 0 : index
    %2 = vector.load %arg2[%c33, %c0_2] : memref<80x128xf32, #tpu.memory_space<vmem>>, vector<1x128xf32>
    %c40 = arith.constant 40 : index
    %c0_3 = arith.constant 0 : index
    %3 = vector.load %arg2[%c40, %c0_3] : memref<80x128xf32, #tpu.memory_space<vmem>>, vector<1x128xf32>
    %4 = tpu.iota {dimensions = array<i32: 1>} : vector<1x128xi32>
    %c0_4 = arith.constant 0 : index
    %c0_5 = arith.constant 0 : index
    %c0_6 = arith.constant 0 : index
    %5 = vector.load %arg1[%c0_4, %c0_5, %c0_6] : memref<8x2x16xf32, #tpu.memory_space<vmem>>, vector<1x2x16xf32>
    %6 = vector.shape_cast %5 : vector<1x2x16xf32> to vector<2x16xf32>
    %7 = vector.extract_strided_slice %6 {offsets = [0, 0], sizes = [1, 16], strides = [1, 1]} : vector<2x16xf32> to vector<1x16xf32>
    %8 = vector.broadcast %7 : vector<1x16xf32> to vector<32x16xf32>
    %9 = arith.mulf %0, %8 : vector<32x16xf32>
    %cst = arith.constant dense<0.000000e+00> : vector<32xf32>
    %10 = vector.multi_reduction <add>, %9, %cst [1] : vector<32x16xf32> to vector<32xf32>
    %11 = vector.shape_cast %10 : vector<32xf32> to vector<32x1xf32>
    %12 = vector.extract_strided_slice %6 {offsets = [1, 0], sizes = [1, 16], strides = [1, 1]} : vector<2x16xf32> to vector<1x16xf32>
    %13 = vector.broadcast %12 : vector<1x16xf32> to vector<32x16xf32>
    %14 = arith.mulf %0, %13 : vector<32x16xf32>
    %cst_7 = arith.constant dense<0.000000e+00> : vector<32xf32>
    %15 = vector.multi_reduction <add>, %14, %cst_7 [1] : vector<32x16xf32> to vector<32xf32>
    %16 = vector.shape_cast %15 : vector<32xf32> to vector<32x1xf32>
    %17 = vector.broadcast %11 : vector<32x1xf32> to vector<32x128xf32>
    %18 = vector.broadcast %1 : vector<1x128xf32> to vector<32x128xf32>
    %19 = arith.mulf %17, %18 : vector<32x128xf32>
    %20 = vector.broadcast %16 : vector<32x1xf32> to vector<32x128xf32>
    %21 = vector.broadcast %2 : vector<1x128xf32> to vector<32x128xf32>
    %22 = arith.mulf %20, %21 : vector<32x128xf32>
    %23 = arith.addf %19, %22 : vector<32x128xf32>
    %24 = arith.negf %23 : vector<32x128xf32>
    %25 = math.exp %24 : vector<32x128xf32>
    %cst_8 = arith.constant 1.000000e+00 : f32
    %26 = vector.broadcast %cst_8 : f32 to vector<32x128xf32>
    %27 = arith.addf %26, %25 : vector<32x128xf32>
    %28 = arith.divf %26, %27 : vector<32x128xf32>
    %29 = vector.broadcast %3 : vector<1x128xf32> to vector<32x128xf32>
    %30 = arith.mulf %28, %29 : vector<32x128xf32>
    %cst_9 = arith.constant dense<0.000000e+00> : vector<32xf32>
    %31 = vector.multi_reduction <add>, %30, %cst_9 [1] : vector<32x128xf32> to vector<32xf32>
    %32 = vector.shape_cast %31 : vector<32xf32> to vector<32x1xf32>
    %33 = arith.negf %32 : vector<32x1xf32>
    %34 = math.exp %33 : vector<32x1xf32>
    %cst_10 = arith.constant 1.000000e+00 : f32
    %35 = vector.broadcast %cst_10 : f32 to vector<32x1xf32>
    %36 = arith.addf %35, %34 : vector<32x1xf32>
    %37 = arith.divf %35, %36 : vector<32x1xf32>
    %c48 = arith.constant 48 : index
    %c0_11 = arith.constant 0 : index
    %38 = vector.load %arg2[%c48, %c0_11] : memref<80x128xf32, #tpu.memory_space<vmem>>, vector<32x128xf32>
    %39 = vector.broadcast %37 : vector<32x1xf32> to vector<32x128xf32>
    %40 = arith.mulf %39, %38 : vector<32x128xf32>
    %cst_12 = arith.constant dense<0.000000e+00> : vector<128xf32>
    %41 = vector.multi_reduction <add>, %40, %cst_12 [0] : vector<32x128xf32> to vector<128xf32>
    %42 = vector.shape_cast %41 : vector<128xf32> to vector<1x128xf32>
    %c100_i32 = arith.constant 100 : i32
    %43 = vector.broadcast %c100_i32 : i32 to vector<1x128xi32>
    %44 = arith.cmpi slt, %4, %43 : vector<1x128xi32>
    %cst_13 = arith.constant -1.000000e+30 : f32
    %45 = vector.broadcast %cst_13 : f32 to vector<1x128xf32>
    %46 = arith.select %44, %42, %45 : vector<1x128xi1>, vector<1x128xf32>
    %cst_14 = arith.constant dense<0xFF800000> : vector<1xf32>
    %47 = vector.multi_reduction <maximumf>, %46, %cst_14 [1] : vector<1x128xf32> to vector<1xf32>
    %48 = vector.shape_cast %47 : vector<1xf32> to vector<1x1xf32>
    %49 = vector.broadcast %48 : vector<1x1xf32> to vector<1x128xf32>
    %50 = arith.subf %46, %49 : vector<1x128xf32>
    %51 = math.exp %50 : vector<1x128xf32>
    %cst_15 = arith.constant dense<0.000000e+00> : vector<1xf32>
    %52 = vector.multi_reduction <add>, %51, %cst_15 [1] : vector<1x128xf32> to vector<1xf32>
    %53 = vector.shape_cast %52 : vector<1xf32> to vector<1x1xf32>
    %54 = math.log %53 : vector<1x1xf32>
    %55 = vector.broadcast %54 : vector<1x1xf32> to vector<1x128xf32>
    %56 = arith.subf %50, %55 : vector<1x128xf32>
    %c0_16 = arith.constant 0 : index
    %c0_17 = arith.constant 0 : index
    %57 = vector.load %arg3[%c0_16, %c0_17] : memref<8x128xf32, #tpu.memory_space<vmem>>, vector<1x128xf32>
    tpu.vector_store %arg3[%c0_16, %c0_17], %56 {strides = array<i32>} : memref<8x128xf32, #tpu.memory_space<vmem>>, vector<1x128xf32>,
    %c1 = arith.constant 1 : index
    %c0_18 = arith.constant 0 : index
    %c0_19 = arith.constant 0 : index
    %58 = vector.load %arg1[%c1, %c0_18, %c0_19] : memref<8x2x16xf32, #tpu.memory_space<vmem>>, vector<1x2x16xf32>
    %59 = vector.shape_cast %58 : vector<1x2x16xf32> to vector<2x16xf32>
    %60 = vector.extract_strided_slice %59 {offsets = [0, 0], sizes = [1, 16], strides = [1, 1]} : vector<2x16xf32> to vector<1x16xf32>
    %61 = vector.broadcast %60 : vector<1x16xf32> to vector<32x16xf32>
    %62 = arith.mulf %0, %61 : vector<32x16xf32>
    %cst_20 = arith.constant dense<0.000000e+00> : vector<32xf32>
    %63 = vector.multi_reduction <add>, %62, %cst_20 [1] : vector<32x16xf32> to vector<32xf32>
    %64 = vector.shape_cast %63 : vector<32xf32> to vector<32x1xf32>
    %65 = vector.extract_strided_slice %59 {offsets = [1, 0], sizes = [1, 16], strides = [1, 1]} : vector<2x16xf32> to vector<1x16xf32>
    %66 = vector.broadcast %65 : vector<1x16xf32> to vector<32x16xf32>
    %67 = arith.mulf %0, %66 : vector<32x16xf32>
    %cst_21 = arith.constant dense<0.000000e+00> : vector<32xf32>
    %68 = vector.multi_reduction <add>, %67, %cst_21 [1] : vector<32x16xf32> to vector<32xf32>
    %69 = vector.shape_cast %68 : vector<32xf32> to vector<32x1xf32>
    %70 = vector.broadcast %64 : vector<32x1xf32> to vector<32x128xf32>
    %71 = vector.broadcast %1 : vector<1x128xf32> to vector<32x128xf32>
    %72 = arith.mulf %70, %71 : vector<32x128xf32>
    %73 = vector.broadcast %69 : vector<32x1xf32> to vector<32x128xf32>
    %74 = vector.broadcast %2 : vector<1x128xf32> to vector<32x128xf32>
    %75 = arith.mulf %73, %74 : vector<32x128xf32>
    %76 = arith.addf %72, %75 : vector<32x128xf32>
    %77 = arith.negf %76 : vector<32x128xf32>
    %78 = math.exp %77 : vector<32x128xf32>
    %cst_22 = arith.constant 1.000000e+00 : f32
    %79 = vector.broadcast %cst_22 : f32 to vector<32x128xf32>
    %80 = arith.addf %79, %78 : vector<32x128xf32>
    %81 = arith.divf %79, %80 : vector<32x128xf32>
    %82 = vector.broadcast %3 : vector<1x128xf32> to vector<32x128xf32>
    %83 = arith.mulf %81, %82 : vector<32x128xf32>
    %cst_23 = arith.constant dense<0.000000e+00> : vector<32xf32>
    %84 = vector.multi_reduction <add>, %83, %cst_23 [1] : vector<32x128xf32> to vector<32xf32>
    %85 = vector.shape_cast %84 : vector<32xf32> to vector<32x1xf32>
    %86 = arith.negf %85 : vector<32x1xf32>
    %87 = math.exp %86 : vector<32x1xf32>
    %cst_24 = arith.constant 1.000000e+00 : f32
    %88 = vector.broadcast %cst_24 : f32 to vector<32x1xf32>
    %89 = arith.addf %88, %87 : vector<32x1xf32>
    %90 = arith.divf %88, %89 : vector<32x1xf32>
    %c48_25 = arith.constant 48 : index
    %c0_26 = arith.constant 0 : index
    %91 = vector.load %arg2[%c48_25, %c0_26] : memref<80x128xf32, #tpu.memory_space<vmem>>, vector<32x128xf32>
    %92 = vector.broadcast %90 : vector<32x1xf32> to vector<32x128xf32>
    %93 = arith.mulf %92, %91 : vector<32x128xf32>
    %cst_27 = arith.constant dense<0.000000e+00> : vector<128xf32>
    %94 = vector.multi_reduction <add>, %93, %cst_27 [0] : vector<32x128xf32> to vector<128xf32>
    %95 = vector.shape_cast %94 : vector<128xf32> to vector<1x128xf32>
    %c100_i32_28 = arith.constant 100 : i32
    %96 = vector.broadcast %c100_i32_28 : i32 to vector<1x128xi32>
    %97 = arith.cmpi slt, %4, %96 : vector<1x128xi32>
    %cst_29 = arith.constant -1.000000e+30 : f32
    %98 = vector.broadcast %cst_29 : f32 to vector<1x128xf32>
    %99 = arith.select %97, %95, %98 : vector<1x128xi1>, vector<1x128xf32>
    %cst_30 = arith.constant dense<0xFF800000> : vector<1xf32>
    %100 = vector.multi_reduction <maximumf>, %99, %cst_30 [1] : vector<1x128xf32> to vector<1xf32>
    %101 = vector.shape_cast %100 : vector<1xf32> to vector<1x1xf32>
    %102 = vector.broadcast %101 : vector<1x1xf32> to vector<1x128xf32>
    %103 = arith.subf %99, %102 : vector<1x128xf32>
    %104 = math.exp %103 : vector<1x128xf32>
    %cst_31 = arith.constant dense<0.000000e+00> : vector<1xf32>
    %105 = vector.multi_reduction <add>, %104, %cst_31 [1] : vector<1x128xf32> to vector<1xf32>
    %106 = vector.shape_cast %105 : vector<1xf32> to vector<1x1xf32>
    %107 = math.log %106 : vector<1x1xf32>
    %108 = vector.broadcast %107 : vector<1x1xf32> to vector<1x128xf32>
    %109 = arith.subf %103, %108 : vector<1x128xf32>
    %c1_32 = arith.constant 1 : index
    %c0_33 = arith.constant 0 : index
    %110 = vector.load %arg3[%c1_32, %c0_33] : memref<8x128xf32, #tpu.memory_space<vmem>>, vector<1x128xf32>
    tpu.vector_store %arg3[%c1_32, %c0_33], %109 {strides = array<i32>} : memref<8x128xf32, #tpu.memory_space<vmem>>, vector<1x128xf32>,
    %c2 = arith.constant 2 : index
    %c0_34 = arith.constant 0 : index
    %c0_35 = arith.constant 0 : index
    %111 = vector.load %arg1[%c2, %c0_34, %c0_35] : memref<8x2x16xf32, #tpu.memory_space<vmem>>, vector<1x2x16xf32>
    %112 = vector.shape_cast %111 : vector<1x2x16xf32> to vector<2x16xf32>
    %113 = vector.extract_strided_slice %112 {offsets = [0, 0], sizes = [1, 16], strides = [1, 1]} : vector<2x16xf32> to vector<1x16xf32>
    %114 = vector.broadcast %113 : vector<1x16xf32> to vector<32x16xf32>
    %115 = arith.mulf %0, %114 : vector<32x16xf32>
    %cst_36 = arith.constant dense<0.000000e+00> : vector<32xf32>
    %116 = vector.multi_reduction <add>, %115, %cst_36 [1] : vector<32x16xf32> to vector<32xf32>
    %117 = vector.shape_cast %116 : vector<32xf32> to vector<32x1xf32>
    %118 = vector.extract_strided_slice %112 {offsets = [1, 0], sizes = [1, 16], strides = [1, 1]} : vector<2x16xf32> to vector<1x16xf32>
    %119 = vector.broadcast %118 : vector<1x16xf32> to vector<32x16xf32>
    %120 = arith.mulf %0, %119 : vector<32x16xf32>
    %cst_37 = arith.constant dense<0.000000e+00> : vector<32xf32>
    %121 = vector.multi_reduction <add>, %120, %cst_37 [1] : vector<32x16xf32> to vector<32xf32>
    %122 = vector.shape_cast %121 : vector<32xf32> to vector<32x1xf32>
    %123 = vector.broadcast %117 : vector<32x1xf32> to vector<32x128xf32>
    %124 = vector.broadcast %1 : vector<1x128xf32> to vector<32x128xf32>
    %125 = arith.mulf %123, %124 : vector<32x128xf32>
    %126 = vector.broadcast %122 : vector<32x1xf32> to vector<32x128xf32>
    %127 = vector.broadcast %2 : vector<1x128xf32> to vector<32x128xf32>
    %128 = arith.mulf %126, %127 : vector<32x128xf32>
    %129 = arith.addf %125, %128 : vector<32x128xf32>
    %130 = arith.negf %129 : vector<32x128xf32>
    %131 = math.exp %130 : vector<32x128xf32>
    %cst_38 = arith.constant 1.000000e+00 : f32
    %132 = vector.broadcast %cst_38 : f32 to vector<32x128xf32>
    %133 = arith.addf %132, %131 : vector<32x128xf32>
    %134 = arith.divf %132, %133 : vector<32x128xf32>
    %135 = vector.broadcast %3 : vector<1x128xf32> to vector<32x128xf32>
    %136 = arith.mulf %134, %135 : vector<32x128xf32>
    %cst_39 = arith.constant dense<0.000000e+00> : vector<32xf32>
    %137 = vector.multi_reduction <add>, %136, %cst_39 [1] : vector<32x128xf32> to vector<32xf32>
    %138 = vector.shape_cast %137 : vector<32xf32> to vector<32x1xf32>
    %139 = arith.negf %138 : vector<32x1xf32>
    %140 = math.exp %139 : vector<32x1xf32>
    %cst_40 = arith.constant 1.000000e+00 : f32
    %141 = vector.broadcast %cst_40 : f32 to vector<32x1xf32>
    %142 = arith.addf %141, %140 : vector<32x1xf32>
    %143 = arith.divf %141, %142 : vector<32x1xf32>
    %c48_41 = arith.constant 48 : index
    %c0_42 = arith.constant 0 : index
    %144 = vector.load %arg2[%c48_41, %c0_42] : memref<80x128xf32, #tpu.memory_space<vmem>>, vector<32x128xf32>
    %145 = vector.broadcast %143 : vector<32x1xf32> to vector<32x128xf32>
    %146 = arith.mulf %145, %144 : vector<32x128xf32>
    %cst_43 = arith.constant dense<0.000000e+00> : vector<128xf32>
    %147 = vector.multi_reduction <add>, %146, %cst_43 [0] : vector<32x128xf32> to vector<128xf32>
    %148 = vector.shape_cast %147 : vector<128xf32> to vector<1x128xf32>
    %c100_i32_44 = arith.constant 100 : i32
    %149 = vector.broadcast %c100_i32_44 : i32 to vector<1x128xi32>
    %150 = arith.cmpi slt, %4, %149 : vector<1x128xi32>
    %cst_45 = arith.constant -1.000000e+30 : f32
    %151 = vector.broadcast %cst_45 : f32 to vector<1x128xf32>
    %152 = arith.select %150, %148, %151 : vector<1x128xi1>, vector<1x128xf32>
    %cst_46 = arith.constant dense<0xFF800000> : vector<1xf32>
    %153 = vector.multi_reduction <maximumf>, %152, %cst_46 [1] : vector<1x128xf32> to vector<1xf32>
    %154 = vector.shape_cast %153 : vector<1xf32> to vector<1x1xf32>
    %155 = vector.broadcast %154 : vector<1x1xf32> to vector<1x128xf32>
    %156 = arith.subf %152, %155 : vector<1x128xf32>
    %157 = math.exp %156 : vector<1x128xf32>
    %cst_47 = arith.constant dense<0.000000e+00> : vector<1xf32>
    %158 = vector.multi_reduction <add>, %157, %cst_47 [1] : vector<1x128xf32> to vector<1xf32>
    %159 = vector.shape_cast %158 : vector<1xf32> to vector<1x1xf32>
    %160 = math.log %159 : vector<1x1xf32>
    %161 = vector.broadcast %160 : vector<1x1xf32> to vector<1x128xf32>
    %162 = arith.subf %156, %161 : vector<1x128xf32>
    %c2_48 = arith.constant 2 : index
    %c0_49 = arith.constant 0 : index
    %163 = vector.load %arg3[%c2_48, %c0_49] : memref<8x128xf32, #tpu.memory_space<vmem>>, vector<1x128xf32>
    tpu.vector_store %arg3[%c2_48, %c0_49], %162 {strides = array<i32>} : memref<8x128xf32, #tpu.memory_space<vmem>>, vector<1x128xf32>,
    %c3 = arith.constant 3 : index
    %c0_50 = arith.constant 0 : index
    %c0_51 = arith.constant 0 : index
    %164 = vector.load %arg1[%c3, %c0_50, %c0_51] : memref<8x2x16xf32, #tpu.memory_space<vmem>>, vector<1x2x16xf32>
    %165 = vector.shape_cast %164 : vector<1x2x16xf32> to vector<2x16xf32>
    %166 = vector.extract_strided_slice %165 {offsets = [0, 0], sizes = [1, 16], strides = [1, 1]} : vector<2x16xf32> to vector<1x16xf32>
    %167 = vector.broadcast %166 : vector<1x16xf32> to vector<32x16xf32>
    %168 = arith.mulf %0, %167 : vector<32x16xf32>
    %cst_52 = arith.constant dense<0.000000e+00> : vector<32xf32>
    %169 = vector.multi_reduction <add>, %168, %cst_52 [1] : vector<32x16xf32> to vector<32xf32>
    %170 = vector.shape_cast %169 : vector<32xf32> to vector<32x1xf32>
    %171 = vector.extract_strided_slice %165 {offsets = [1, 0], sizes = [1, 16], strides = [1, 1]} : vector<2x16xf32> to vector<1x16xf32>
    %172 = vector.broadcast %171 : vector<1x16xf32> to vector<32x16xf32>
    %173 = arith.mulf %0, %172 : vector<32x16xf32>
    %cst_53 = arith.constant dense<0.000000e+00> : vector<32xf32>
    %174 = vector.multi_reduction <add>, %173, %cst_53 [1] : vector<32x16xf32> to vector<32xf32>
    %175 = vector.shape_cast %174 : vector<32xf32> to vector<32x1xf32>
    %176 = vector.broadcast %170 : vector<32x1xf32> to vector<32x128xf32>
    %177 = vector.broadcast %1 : vector<1x128xf32> to vector<32x128xf32>
    %178 = arith.mulf %176, %177 : vector<32x128xf32>
    %179 = vector.broadcast %175 : vector<32x1xf32> to vector<32x128xf32>
    %180 = vector.broadcast %2 : vector<1x128xf32> to vector<32x128xf32>
    %181 = arith.mulf %179, %180 : vector<32x128xf32>
    %182 = arith.addf %178, %181 : vector<32x128xf32>
    %183 = arith.negf %182 : vector<32x128xf32>
    %184 = math.exp %183 : vector<32x128xf32>
    %cst_54 = arith.constant 1.000000e+00 : f32
    %185 = vector.broadcast %cst_54 : f32 to vector<32x128xf32>
    %186 = arith.addf %185, %184 : vector<32x128xf32>
    %187 = arith.divf %185, %186 : vector<32x128xf32>
    %188 = vector.broadcast %3 : vector<1x128xf32> to vector<32x128xf32>
    %189 = arith.mulf %187, %188 : vector<32x128xf32>
    %cst_55 = arith.constant dense<0.000000e+00> : vector<32xf32>
    %190 = vector.multi_reduction <add>, %189, %cst_55 [1] : vector<32x128xf32> to vector<32xf32>
    %191 = vector.shape_cast %190 : vector<32xf32> to vector<32x1xf32>
    %192 = arith.negf %191 : vector<32x1xf32>
    %193 = math.exp %192 : vector<32x1xf32>
    %cst_56 = arith.constant 1.000000e+00 : f32
    %194 = vector.broadcast %cst_56 : f32 to vector<32x1xf32>
    %195 = arith.addf %194, %193 : vector<32x1xf32>
    %196 = arith.divf %194, %195 : vector<32x1xf32>
    %c48_57 = arith.constant 48 : index
    %c0_58 = arith.constant 0 : index
    %197 = vector.load %arg2[%c48_57, %c0_58] : memref<80x128xf32, #tpu.memory_space<vmem>>, vector<32x128xf32>
    %198 = vector.broadcast %196 : vector<32x1xf32> to vector<32x128xf32>
    %199 = arith.mulf %198, %197 : vector<32x128xf32>
    %cst_59 = arith.constant dense<0.000000e+00> : vector<128xf32>
    %200 = vector.multi_reduction <add>, %199, %cst_59 [0] : vector<32x128xf32> to vector<128xf32>
    %201 = vector.shape_cast %200 : vector<128xf32> to vector<1x128xf32>
    %c100_i32_60 = arith.constant 100 : i32
    %202 = vector.broadcast %c100_i32_60 : i32 to vector<1x128xi32>
    %203 = arith.cmpi slt, %4, %202 : vector<1x128xi32>
    %cst_61 = arith.constant -1.000000e+30 : f32
    %204 = vector.broadcast %cst_61 : f32 to vector<1x128xf32>
    %205 = arith.select %203, %201, %204 : vector<1x128xi1>, vector<1x128xf32>
    %cst_62 = arith.constant dense<0xFF800000> : vector<1xf32>
    %206 = vector.multi_reduction <maximumf>, %205, %cst_62 [1] : vector<1x128xf32> to vector<1xf32>
    %207 = vector.shape_cast %206 : vector<1xf32> to vector<1x1xf32>
    %208 = vector.broadcast %207 : vector<1x1xf32> to vector<1x128xf32>
    %209 = arith.subf %205, %208 : vector<1x128xf32>
    %210 = math.exp %209 : vector<1x128xf32>
    %cst_63 = arith.constant dense<0.000000e+00> : vector<1xf32>
    %211 = vector.multi_reduction <add>, %210, %cst_63 [1] : vector<1x128xf32> to vector<1xf32>
    %212 = vector.shape_cast %211 : vector<1xf32> to vector<1x1xf32>
    %213 = math.log %212 : vector<1x1xf32>
    %214 = vector.broadcast %213 : vector<1x1xf32> to vector<1x128xf32>
    %215 = arith.subf %209, %214 : vector<1x128xf32>
    %c3_64 = arith.constant 3 : index
    %c0_65 = arith.constant 0 : index
    %216 = vector.load %arg3[%c3_64, %c0_65] : memref<8x128xf32, #tpu.memory_space<vmem>>, vector<1x128xf32>
    tpu.vector_store %arg3[%c3_64, %c0_65], %215 {strides = array<i32>} : memref<8x128xf32, #tpu.memory_space<vmem>>, vector<1x128xf32>,
    %c4 = arith.constant 4 : index
    %c0_66 = arith.constant 0 : index
    %c0_67 = arith.constant 0 : index
    %217 = vector.load %arg1[%c4, %c0_66, %c0_67] : memref<8x2x16xf32, #tpu.memory_space<vmem>>, vector<1x2x16xf32>
    %218 = vector.shape_cast %217 : vector<1x2x16xf32> to vector<2x16xf32>
    %219 = vector.extract_strided_slice %218 {offsets = [0, 0], sizes = [1, 16], strides = [1, 1]} : vector<2x16xf32> to vector<1x16xf32>
    %220 = vector.broadcast %219 : vector<1x16xf32> to vector<32x16xf32>
    %221 = arith.mulf %0, %220 : vector<32x16xf32>
    %cst_68 = arith.constant dense<0.000000e+00> : vector<32xf32>
    %222 = vector.multi_reduction <add>, %221, %cst_68 [1] : vector<32x16xf32> to vector<32xf32>
    %223 = vector.shape_cast %222 : vector<32xf32> to vector<32x1xf32>
    %224 = vector.extract_strided_slice %218 {offsets = [1, 0], sizes = [1, 16], strides = [1, 1]} : vector<2x16xf32> to vector<1x16xf32>
    %225 = vector.broadcast %224 : vector<1x16xf32> to vector<32x16xf32>
    %226 = arith.mulf %0, %225 : vector<32x16xf32>
    %cst_69 = arith.constant dense<0.000000e+00> : vector<32xf32>
    %227 = vector.multi_reduction <add>, %226, %cst_69 [1] : vector<32x16xf32> to vector<32xf32>
    %228 = vector.shape_cast %227 : vector<32xf32> to vector<32x1xf32>
    %229 = vector.broadcast %223 : vector<32x1xf32> to vector<32x128xf32>
    %230 = vector.broadcast %1 : vector<1x128xf32> to vector<32x128xf32>
    %231 = arith.mulf %229, %230 : vector<32x128xf32>
    %232 = vector.broadcast %228 : vector<32x1xf32> to vector<32x128xf32>
    %233 = vector.broadcast %2 : vector<1x128xf32> to vector<32x128xf32>
    %234 = arith.mulf %232, %233 : vector<32x128xf32>
    %235 = arith.addf %231, %234 : vector<32x128xf32>
    %236 = arith.negf %235 : vector<32x128xf32>
    %237 = math.exp %236 : vector<32x128xf32>
    %cst_70 = arith.constant 1.000000e+00 : f32
    %238 = vector.broadcast %cst_70 : f32 to vector<32x128xf32>
    %239 = arith.addf %238, %237 : vector<32x128xf32>
    %240 = arith.divf %238, %239 : vector<32x128xf32>
    %241 = vector.broadcast %3 : vector<1x128xf32> to vector<32x128xf32>
    %242 = arith.mulf %240, %241 : vector<32x128xf32>
    %cst_71 = arith.constant dense<0.000000e+00> : vector<32xf32>
    %243 = vector.multi_reduction <add>, %242, %cst_71 [1] : vector<32x128xf32> to vector<32xf32>
    %244 = vector.shape_cast %243 : vector<32xf32> to vector<32x1xf32>
    %245 = arith.negf %244 : vector<32x1xf32>
    %246 = math.exp %245 : vector<32x1xf32>
    %cst_72 = arith.constant 1.000000e+00 : f32
    %247 = vector.broadcast %cst_72 : f32 to vector<32x1xf32>
    %248 = arith.addf %247, %246 : vector<32x1xf32>
    %249 = arith.divf %247, %248 : vector<32x1xf32>
    %c48_73 = arith.constant 48 : index
    %c0_74 = arith.constant 0 : index
    %250 = vector.load %arg2[%c48_73, %c0_74] : memref<80x128xf32, #tpu.memory_space<vmem>>, vector<32x128xf32>
    %251 = vector.broadcast %249 : vector<32x1xf32> to vector<32x128xf32>
    %252 = arith.mulf %251, %250 : vector<32x128xf32>
    %cst_75 = arith.constant dense<0.000000e+00> : vector<128xf32>
    %253 = vector.multi_reduction <add>, %252, %cst_75 [0] : vector<32x128xf32> to vector<128xf32>
    %254 = vector.shape_cast %253 : vector<128xf32> to vector<1x128xf32>
    %c100_i32_76 = arith.constant 100 : i32
    %255 = vector.broadcast %c100_i32_76 : i32 to vector<1x128xi32>
    %256 = arith.cmpi slt, %4, %255 : vector<1x128xi32>
    %cst_77 = arith.constant -1.000000e+30 : f32
    %257 = vector.broadcast %cst_77 : f32 to vector<1x128xf32>
    %258 = arith.select %256, %254, %257 : vector<1x128xi1>, vector<1x128xf32>
    %cst_78 = arith.constant dense<0xFF800000> : vector<1xf32>
    %259 = vector.multi_reduction <maximumf>, %258, %cst_78 [1] : vector<1x128xf32> to vector<1xf32>
    %260 = vector.shape_cast %259 : vector<1xf32> to vector<1x1xf32>
    %261 = vector.broadcast %260 : vector<1x1xf32> to vector<1x128xf32>
    %262 = arith.subf %258, %261 : vector<1x128xf32>
    %263 = math.exp %262 : vector<1x128xf32>
    %cst_79 = arith.constant dense<0.000000e+00> : vector<1xf32>
    %264 = vector.multi_reduction <add>, %263, %cst_79 [1] : vector<1x128xf32> to vector<1xf32>
    %265 = vector.shape_cast %264 : vector<1xf32> to vector<1x1xf32>
    %266 = math.log %265 : vector<1x1xf32>
    %267 = vector.broadcast %266 : vector<1x1xf32> to vector<1x128xf32>
    %268 = arith.subf %262, %267 : vector<1x128xf32>
    %c4_80 = arith.constant 4 : index
    %c0_81 = arith.constant 0 : index
    %269 = vector.load %arg3[%c4_80, %c0_81] : memref<8x128xf32, #tpu.memory_space<vmem>>, vector<1x128xf32>
    tpu.vector_store %arg3[%c4_80, %c0_81], %268 {strides = array<i32>} : memref<8x128xf32, #tpu.memory_space<vmem>>, vector<1x128xf32>,
    %c5 = arith.constant 5 : index
    %c0_82 = arith.constant 0 : index
    %c0_83 = arith.constant 0 : index
    %270 = vector.load %arg1[%c5, %c0_82, %c0_83] : memref<8x2x16xf32, #tpu.memory_space<vmem>>, vector<1x2x16xf32>
    %271 = vector.shape_cast %270 : vector<1x2x16xf32> to vector<2x16xf32>
    %272 = vector.extract_strided_slice %271 {offsets = [0, 0], sizes = [1, 16], strides = [1, 1]} : vector<2x16xf32> to vector<1x16xf32>
    %273 = vector.broadcast %272 : vector<1x16xf32> to vector<32x16xf32>
    %274 = arith.mulf %0, %273 : vector<32x16xf32>
    %cst_84 = arith.constant dense<0.000000e+00> : vector<32xf32>
    %275 = vector.multi_reduction <add>, %274, %cst_84 [1] : vector<32x16xf32> to vector<32xf32>
    %276 = vector.shape_cast %275 : vector<32xf32> to vector<32x1xf32>
    %277 = vector.extract_strided_slice %271 {offsets = [1, 0], sizes = [1, 16], strides = [1, 1]} : vector<2x16xf32> to vector<1x16xf32>
    %278 = vector.broadcast %277 : vector<1x16xf32> to vector<32x16xf32>
    %279 = arith.mulf %0, %278 : vector<32x16xf32>
    %cst_85 = arith.constant dense<0.000000e+00> : vector<32xf32>
    %280 = vector.multi_reduction <add>, %279, %cst_85 [1] : vector<32x16xf32> to vector<32xf32>
    %281 = vector.shape_cast %280 : vector<32xf32> to vector<32x1xf32>
    %282 = vector.broadcast %276 : vector<32x1xf32> to vector<32x128xf32>
    %283 = vector.broadcast %1 : vector<1x128xf32> to vector<32x128xf32>
    %284 = arith.mulf %282, %283 : vector<32x128xf32>
    %285 = vector.broadcast %281 : vector<32x1xf32> to vector<32x128xf32>
    %286 = vector.broadcast %2 : vector<1x128xf32> to vector<32x128xf32>
    %287 = arith.mulf %285, %286 : vector<32x128xf32>
    %288 = arith.addf %284, %287 : vector<32x128xf32>
    %289 = arith.negf %288 : vector<32x128xf32>
    %290 = math.exp %289 : vector<32x128xf32>
    %cst_86 = arith.constant 1.000000e+00 : f32
    %291 = vector.broadcast %cst_86 : f32 to vector<32x128xf32>
    %292 = arith.addf %291, %290 : vector<32x128xf32>
    %293 = arith.divf %291, %292 : vector<32x128xf32>
    %294 = vector.broadcast %3 : vector<1x128xf32> to vector<32x128xf32>
    %295 = arith.mulf %293, %294 : vector<32x128xf32>
    %cst_87 = arith.constant dense<0.000000e+00> : vector<32xf32>
    %296 = vector.multi_reduction <add>, %295, %cst_87 [1] : vector<32x128xf32> to vector<32xf32>
    %297 = vector.shape_cast %296 : vector<32xf32> to vector<32x1xf32>
    %298 = arith.negf %297 : vector<32x1xf32>
    %299 = math.exp %298 : vector<32x1xf32>
    %cst_88 = arith.constant 1.000000e+00 : f32
    %300 = vector.broadcast %cst_88 : f32 to vector<32x1xf32>
    %301 = arith.addf %300, %299 : vector<32x1xf32>
    %302 = arith.divf %300, %301 : vector<32x1xf32>
    %c48_89 = arith.constant 48 : index
    %c0_90 = arith.constant 0 : index
    %303 = vector.load %arg2[%c48_89, %c0_90] : memref<80x128xf32, #tpu.memory_space<vmem>>, vector<32x128xf32>
    %304 = vector.broadcast %302 : vector<32x1xf32> to vector<32x128xf32>
    %305 = arith.mulf %304, %303 : vector<32x128xf32>
    %cst_91 = arith.constant dense<0.000000e+00> : vector<128xf32>
    %306 = vector.multi_reduction <add>, %305, %cst_91 [0] : vector<32x128xf32> to vector<128xf32>
    %307 = vector.shape_cast %306 : vector<128xf32> to vector<1x128xf32>
    %c100_i32_92 = arith.constant 100 : i32
    %308 = vector.broadcast %c100_i32_92 : i32 to vector<1x128xi32>
    %309 = arith.cmpi slt, %4, %308 : vector<1x128xi32>
    %cst_93 = arith.constant -1.000000e+30 : f32
    %310 = vector.broadcast %cst_93 : f32 to vector<1x128xf32>
    %311 = arith.select %309, %307, %310 : vector<1x128xi1>, vector<1x128xf32>
    %cst_94 = arith.constant dense<0xFF800000> : vector<1xf32>
    %312 = vector.multi_reduction <maximumf>, %311, %cst_94 [1] : vector<1x128xf32> to vector<1xf32>
    %313 = vector.shape_cast %312 : vector<1xf32> to vector<1x1xf32>
    %314 = vector.broadcast %313 : vector<1x1xf32> to vector<1x128xf32>
    %315 = arith.subf %311, %314 : vector<1x128xf32>
    %316 = math.exp %315 : vector<1x128xf32>
    %cst_95 = arith.constant dense<0.000000e+00> : vector<1xf32>
    %317 = vector.multi_reduction <add>, %316, %cst_95 [1] : vector<1x128xf32> to vector<1xf32>
    %318 = vector.shape_cast %317 : vector<1xf32> to vector<1x1xf32>
    %319 = math.log %318 : vector<1x1xf32>
    %320 = vector.broadcast %319 : vector<1x1xf32> to vector<1x128xf32>
    %321 = arith.subf %315, %320 : vector<1x128xf32>
    %c5_96 = arith.constant 5 : index
    %c0_97 = arith.constant 0 : index
    %322 = vector.load %arg3[%c5_96, %c0_97] : memref<8x128xf32, #tpu.memory_space<vmem>>, vector<1x128xf32>
    tpu.vector_store %arg3[%c5_96, %c0_97], %321 {strides = array<i32>} : memref<8x128xf32, #tpu.memory_space<vmem>>, vector<1x128xf32>,
    %c6 = arith.constant 6 : index
    %c0_98 = arith.constant 0 : index
    %c0_99 = arith.constant 0 : index
    %323 = vector.load %arg1[%c6, %c0_98, %c0_99] : memref<8x2x16xf32, #tpu.memory_space<vmem>>, vector<1x2x16xf32>
    %324 = vector.shape_cast %323 : vector<1x2x16xf32> to vector<2x16xf32>
    %325 = vector.extract_strided_slice %324 {offsets = [0, 0], sizes = [1, 16], strides = [1, 1]} : vector<2x16xf32> to vector<1x16xf32>
    %326 = vector.broadcast %325 : vector<1x16xf32> to vector<32x16xf32>
    %327 = arith.mulf %0, %326 : vector<32x16xf32>
    %cst_100 = arith.constant dense<0.000000e+00> : vector<32xf32>
    %328 = vector.multi_reduction <add>, %327, %cst_100 [1] : vector<32x16xf32> to vector<32xf32>
    %329 = vector.shape_cast %328 : vector<32xf32> to vector<32x1xf32>
    %330 = vector.extract_strided_slice %324 {offsets = [1, 0], sizes = [1, 16], strides = [1, 1]} : vector<2x16xf32> to vector<1x16xf32>
    %331 = vector.broadcast %330 : vector<1x16xf32> to vector<32x16xf32>
    %332 = arith.mulf %0, %331 : vector<32x16xf32>
    %cst_101 = arith.constant dense<0.000000e+00> : vector<32xf32>
    %333 = vector.multi_reduction <add>, %332, %cst_101 [1] : vector<32x16xf32> to vector<32xf32>
    %334 = vector.shape_cast %333 : vector<32xf32> to vector<32x1xf32>
    %335 = vector.broadcast %329 : vector<32x1xf32> to vector<32x128xf32>
    %336 = vector.broadcast %1 : vector<1x128xf32> to vector<32x128xf32>
    %337 = arith.mulf %335, %336 : vector<32x128xf32>
    %338 = vector.broadcast %334 : vector<32x1xf32> to vector<32x128xf32>
    %339 = vector.broadcast %2 : vector<1x128xf32> to vector<32x128xf32>
    %340 = arith.mulf %338, %339 : vector<32x128xf32>
    %341 = arith.addf %337, %340 : vector<32x128xf32>
    %342 = arith.negf %341 : vector<32x128xf32>
    %343 = math.exp %342 : vector<32x128xf32>
    %cst_102 = arith.constant 1.000000e+00 : f32
    %344 = vector.broadcast %cst_102 : f32 to vector<32x128xf32>
    %345 = arith.addf %344, %343 : vector<32x128xf32>
    %346 = arith.divf %344, %345 : vector<32x128xf32>
    %347 = vector.broadcast %3 : vector<1x128xf32> to vector<32x128xf32>
    %348 = arith.mulf %346, %347 : vector<32x128xf32>
    %cst_103 = arith.constant dense<0.000000e+00> : vector<32xf32>
    %349 = vector.multi_reduction <add>, %348, %cst_103 [1] : vector<32x128xf32> to vector<32xf32>
    %350 = vector.shape_cast %349 : vector<32xf32> to vector<32x1xf32>
    %351 = arith.negf %350 : vector<32x1xf32>
    %352 = math.exp %351 : vector<32x1xf32>
    %cst_104 = arith.constant 1.000000e+00 : f32
    %353 = vector.broadcast %cst_104 : f32 to vector<32x1xf32>
    %354 = arith.addf %353, %352 : vector<32x1xf32>
    %355 = arith.divf %353, %354 : vector<32x1xf32>
    %c48_105 = arith.constant 48 : index
    %c0_106 = arith.constant 0 : index
    %356 = vector.load %arg2[%c48_105, %c0_106] : memref<80x128xf32, #tpu.memory_space<vmem>>, vector<32x128xf32>
    %357 = vector.broadcast %355 : vector<32x1xf32> to vector<32x128xf32>
    %358 = arith.mulf %357, %356 : vector<32x128xf32>
    %cst_107 = arith.constant dense<0.000000e+00> : vector<128xf32>
    %359 = vector.multi_reduction <add>, %358, %cst_107 [0] : vector<32x128xf32> to vector<128xf32>
    %360 = vector.shape_cast %359 : vector<128xf32> to vector<1x128xf32>
    %c100_i32_108 = arith.constant 100 : i32
    %361 = vector.broadcast %c100_i32_108 : i32 to vector<1x128xi32>
    %362 = arith.cmpi slt, %4, %361 : vector<1x128xi32>
    %cst_109 = arith.constant -1.000000e+30 : f32
    %363 = vector.broadcast %cst_109 : f32 to vector<1x128xf32>
    %364 = arith.select %362, %360, %363 : vector<1x128xi1>, vector<1x128xf32>
    %cst_110 = arith.constant dense<0xFF800000> : vector<1xf32>
    %365 = vector.multi_reduction <maximumf>, %364, %cst_110 [1] : vector<1x128xf32> to vector<1xf32>
    %366 = vector.shape_cast %365 : vector<1xf32> to vector<1x1xf32>
    %367 = vector.broadcast %366 : vector<1x1xf32> to vector<1x128xf32>
    %368 = arith.subf %364, %367 : vector<1x128xf32>
    %369 = math.exp %368 : vector<1x128xf32>
    %cst_111 = arith.constant dense<0.000000e+00> : vector<1xf32>
    %370 = vector.multi_reduction <add>, %369, %cst_111 [1] : vector<1x128xf32> to vector<1xf32>
    %371 = vector.shape_cast %370 : vector<1xf32> to vector<1x1xf32>
    %372 = math.log %371 : vector<1x1xf32>
    %373 = vector.broadcast %372 : vector<1x1xf32> to vector<1x128xf32>
    %374 = arith.subf %368, %373 : vector<1x128xf32>
    %c6_112 = arith.constant 6 : index
    %c0_113 = arith.constant 0 : index
    %375 = vector.load %arg3[%c6_112, %c0_113] : memref<8x128xf32, #tpu.memory_space<vmem>>, vector<1x128xf32>
    tpu.vector_store %arg3[%c6_112, %c0_113], %374 {strides = array<i32>} : memref<8x128xf32, #tpu.memory_space<vmem>>, vector<1x128xf32>,
    %c7 = arith.constant 7 : index
    %c0_114 = arith.constant 0 : index
    %c0_115 = arith.constant 0 : index
    %376 = vector.load %arg1[%c7, %c0_114, %c0_115] : memref<8x2x16xf32, #tpu.memory_space<vmem>>, vector<1x2x16xf32>
    %377 = vector.shape_cast %376 : vector<1x2x16xf32> to vector<2x16xf32>
    %378 = vector.extract_strided_slice %377 {offsets = [0, 0], sizes = [1, 16], strides = [1, 1]} : vector<2x16xf32> to vector<1x16xf32>
    %379 = vector.broadcast %378 : vector<1x16xf32> to vector<32x16xf32>
    %380 = arith.mulf %0, %379 : vector<32x16xf32>
    %cst_116 = arith.constant dense<0.000000e+00> : vector<32xf32>
    %381 = vector.multi_reduction <add>, %380, %cst_116 [1] : vector<32x16xf32> to vector<32xf32>
    %382 = vector.shape_cast %381 : vector<32xf32> to vector<32x1xf32>
    %383 = vector.extract_strided_slice %377 {offsets = [1, 0], sizes = [1, 16], strides = [1, 1]} : vector<2x16xf32> to vector<1x16xf32>
    %384 = vector.broadcast %383 : vector<1x16xf32> to vector<32x16xf32>
    %385 = arith.mulf %0, %384 : vector<32x16xf32>
    %cst_117 = arith.constant dense<0.000000e+00> : vector<32xf32>
    %386 = vector.multi_reduction <add>, %385, %cst_117 [1] : vector<32x16xf32> to vector<32xf32>
    %387 = vector.shape_cast %386 : vector<32xf32> to vector<32x1xf32>
    %388 = vector.broadcast %382 : vector<32x1xf32> to vector<32x128xf32>
    %389 = vector.broadcast %1 : vector<1x128xf32> to vector<32x128xf32>
    %390 = arith.mulf %388, %389 : vector<32x128xf32>
    %391 = vector.broadcast %387 : vector<32x1xf32> to vector<32x128xf32>
    %392 = vector.broadcast %2 : vector<1x128xf32> to vector<32x128xf32>
    %393 = arith.mulf %391, %392 : vector<32x128xf32>
    %394 = arith.addf %390, %393 : vector<32x128xf32>
    %395 = arith.negf %394 : vector<32x128xf32>
    %396 = math.exp %395 : vector<32x128xf32>
    %cst_118 = arith.constant 1.000000e+00 : f32
    %397 = vector.broadcast %cst_118 : f32 to vector<32x128xf32>
    %398 = arith.addf %397, %396 : vector<32x128xf32>
    %399 = arith.divf %397, %398 : vector<32x128xf32>
    %400 = vector.broadcast %3 : vector<1x128xf32> to vector<32x128xf32>
    %401 = arith.mulf %399, %400 : vector<32x128xf32>
    %cst_119 = arith.constant dense<0.000000e+00> : vector<32xf32>
    %402 = vector.multi_reduction <add>, %401, %cst_119 [1] : vector<32x128xf32> to vector<32xf32>
    %403 = vector.shape_cast %402 : vector<32xf32> to vector<32x1xf32>
    %404 = arith.negf %403 : vector<32x1xf32>
    %405 = math.exp %404 : vector<32x1xf32>
    %cst_120 = arith.constant 1.000000e+00 : f32
    %406 = vector.broadcast %cst_120 : f32 to vector<32x1xf32>
    %407 = arith.addf %406, %405 : vector<32x1xf32>
    %408 = arith.divf %406, %407 : vector<32x1xf32>
    %c48_121 = arith.constant 48 : index
    %c0_122 = arith.constant 0 : index
    %409 = vector.load %arg2[%c48_121, %c0_122] : memref<80x128xf32, #tpu.memory_space<vmem>>, vector<32x128xf32>
    %410 = vector.broadcast %408 : vector<32x1xf32> to vector<32x128xf32>
    %411 = arith.mulf %410, %409 : vector<32x128xf32>
    %cst_123 = arith.constant dense<0.000000e+00> : vector<128xf32>
    %412 = vector.multi_reduction <add>, %411, %cst_123 [0] : vector<32x128xf32> to vector<128xf32>
    %413 = vector.shape_cast %412 : vector<128xf32> to vector<1x128xf32>
    %c100_i32_124 = arith.constant 100 : i32
    %414 = vector.broadcast %c100_i32_124 : i32 to vector<1x128xi32>
    %415 = arith.cmpi slt, %4, %414 : vector<1x128xi32>
    %cst_125 = arith.constant -1.000000e+30 : f32
    %416 = vector.broadcast %cst_125 : f32 to vector<1x128xf32>
    %417 = arith.select %415, %413, %416 : vector<1x128xi1>, vector<1x128xf32>
    %cst_126 = arith.constant dense<0xFF800000> : vector<1xf32>
    %418 = vector.multi_reduction <maximumf>, %417, %cst_126 [1] : vector<1x128xf32> to vector<1xf32>
    %419 = vector.shape_cast %418 : vector<1xf32> to vector<1x1xf32>
    %420 = vector.broadcast %419 : vector<1x1xf32> to vector<1x128xf32>
    %421 = arith.subf %417, %420 : vector<1x128xf32>
    %422 = math.exp %421 : vector<1x128xf32>
    %cst_127 = arith.constant dense<0.000000e+00> : vector<1xf32>
    %423 = vector.multi_reduction <add>, %422, %cst_127 [1] : vector<1x128xf32> to vector<1xf32>
    %424 = vector.shape_cast %423 : vector<1xf32> to vector<1x1xf32>
    %425 = math.log %424 : vector<1x1xf32>
    %426 = vector.broadcast %425 : vector<1x1xf32> to vector<1x128xf32>
    %427 = arith.subf %421, %426 : vector<1x128xf32>
    %c7_128 = arith.constant 7 : index
    %c0_129 = arith.constant 0 : index
    %428 = vector.load %arg3[%c7_128, %c0_129] : memref<8x128xf32, #tpu.memory_space<vmem>>, vector<1x128xf32>
    tpu.vector_store %arg3[%c7_128, %c0_129], %427 {strides = array<i32>} : memref<8x128xf32, #tpu.memory_space<vmem>>, vector<1x128xf32>,
    return
  }
  func.func @transform_0(%arg0: i32) -> (i32, i32, i32) {
    %c0_i32 = arith.constant 0 : i32
    %c0_i32_0 = arith.constant 0 : i32
    %c0_i32_1 = arith.constant 0 : i32
    return %arg0, %c0_i32, %c0_i32_0 : i32, i32, i32
  }
  func.func @transform_1(%arg0: i32) -> (i32, i32) {
    %c0_i32 = arith.constant 0 : i32
    %c0_i32_0 = arith.constant 0 : i32
    %c0_i32_1 = arith.constant 0 : i32
    return %c0_i32, %c0_i32_0 : i32, i32
  }
  func.func @transform_2(%arg0: i32) -> (i32, i32) {
    %c0_i32 = arith.constant 0 : i32
    %c0_i32_0 = arith.constant 0 : i32
    return %arg0, %c0_i32 : i32, i32
  }
}

</mosaic_0001>

<llo_original>
// kernel: informed_sender_forward.1
$region0: #{informed_sender_forward.1}
  #allocation0 [shape = 'u32[]', space=smem, size = 0x4, offset = 0x4, fixed_abs, tag = 'smem constant byte address 0x4 - core index']
  #allocation1 [shape = 'u32[72,128]{1,0:T(1,128)}', space=vmem, size = 0x9000, scoped, tag = 'internal scratch']
  %s0 = inlined_call_operand.hbm [shape: f32[16,2,16], index: 0, kind: input, shape index: {}]
  %s1 = inlined_call_operand.hbm [shape: f32[80,128], index: 1, kind: input, shape index: {}]
  %s2 = inlined_call_operand.hbm [shape: f32[16,128], index: 2, kind: output, shape index: {}]
  %s3 = sld [smem:[#allocation0]]
  $region49: #{informed_sender_forward.1} parent=0
    _
  %s5 = ssub.s32 1, %s3
  %s6 = scalar_select 0, %s5, %s3
  $region1: #{informed_sender_forward.1} parent=0
    #allocation2 [shape = 'u8[16384]{0}', space=vmem, size = 0x4000, scoped, tag = 'input window, operand 0']
    #allocation3 [shape = 's32[2]{0}', space=sflag, size = 0x8, scoped, tag = 'scoped memory for informed_sender_forward.1']
    #allocation4 [shape = 's32[2]{0}', space=sflag, size = 0x8, scoped, tag = 'scoped memory for informed_sender_forward.1']
    #allocation5 [shape = 'u8[40960]{0}', space=vmem, size = 0xa000, scoped, tag = 'input window, operand 1, single buffered']
    #allocation6 [shape = 's32[1]{0}', space=sflag, size = 0x4, scoped, tag = 'scoped memory for informed_sender_forward.1']
    #allocation7 [shape = 'u8[8192]{0}', space=vmem, size = 0x2000, scoped, tag = 'output window, operand 0']
    %7 = vsyncpa [#allocation3], 0
    %s8 = scalar_lea.sflag [#allocation3], 1
    %9 = vsyncpa %s8, 0
    %10 = vsyncpa [#allocation6], 0
    %11 = vsyncpa [#allocation4], 0
    %s12 = scalar_lea.sflag [#allocation4], 1
    %13 = vsyncpa %s12, 0
    loop: start=0, step=1, limit=4
    $region2: #{informed_sender_forward.1} parent=1 // loop_pre_header
      _
    $region3: #{informed_sender_forward.1} parent=1 // loop_header
      %s15 = sphi 0, %s19
      %p16 = scmp.ge.s32.totalorder %s15, 4
      %s25 = sphi 0, %s27
      %s28 = sphi 0, %s25
      %s29 = sphi 0, %s28
      %s45 = sphi 0, %s29
      %s49 = sphi 0, %s49
      %s51 = sphi 0, %s49
      %s52 = sphi 0, %s51
      %s66 = sphi 0, %s52
      %s72 = sphi 0, %s74
      %s75 = sphi 0, %s72
      %s76 = sphi 0, %s75
      %s92 = sphi 0, %s76
    $region4: #{informed_sender_forward.1} parent=1 // loop_header_branch
      %18 = sbr.rel (%p16) target = $region8
    $region5: #{informed_sender_forward.1} parent=1 // loop_body
      %s20 = ssub.s32 %s15, 1
      %s21 = ssub.s32 %s15, 2
      %s22 = sadd.s32 %s15, 1
      %s23 = ssub.s32 %s15, %s22
      %p24 = scmp.eq.s32.totalorder %s23, 0
      %s26 = sadd.s32 %s25, 1
      %s27 = scalar_select %p24, %s25, %s26
      %p30 = pneg %p24
      %p31 = scmp.eq.s32.totalorder %s15, 1
      %p32 = por %p30, %p31
      %p33 = scmp.ne.s32.totalorder %s25, %s28
      %p34 = scmp.eq.s32.totalorder %s15, 0
      %p35 = por %p33, %p34
      %p36 = scmp.ne.s32.totalorder %s25, %s28
      %p37 = scmp.eq.s32.totalorder %s20, 1
      %p38 = por %p36, %p37
      %p39 = scmp.ne.s32.totalorder %s28, %s29
      %p40 = scmp.eq.s32.totalorder %s20, 0
      %p41 = por %p39, %p40
      %p42 = scmp.ne.s32.totalorder %s28, %s29
      %p43 = scmp.eq.s32.totalorder %s21, 1
      %p44 = por %p42, %p43
      %p46 = scmp.ne.s32.totalorder %s29, %s45
      %p47 = scmp.eq.s32.totalorder %s21, 0
      %p48 = por %p46, %p47
      %s50 = sadd.s32 %s49, 1
      %p53 = scmp.eq.s32.totalorder %s15, 1
      %p54 = scmp.ne.s32.totalorder %s49, %s51
      %p55 = scmp.eq.s32.totalorder %s15, 0
      %p56 = por %p54, %p55
      %p57 = scmp.ne.s32.totalorder %s49, %s51
      %p58 = scmp.eq.s32.totalorder %s20, 1
      %p59 = por %p57, %p58
      %p60 = scmp.ne.s32.totalorder %s51, %s52
      %p61 = scmp.eq.s32.totalorder %s20, 0
      %p62 = por %p60, %p61
      %p63 = scmp.ne.s32.totalorder %s51, %s52
      %p64 = scmp.eq.s32.totalorder %s21, 1
      %p65 = por %p63, %p64
      %p67 = scmp.ne.s32.totalorder %s52, %s66
      %p68 = scmp.eq.s32.totalorder %s21, 0
      %p69 = por %p67, %p68
      %s70 = ssub.s32 %s15, %s22
      %p71 = scmp.eq.s32.totalorder %s70, 0
      %s73 = sadd.s32 %s72, 1
      %s74 = scalar_select %p71, %s72, %s73
      %p77 = pneg %p71
      %p78 = scmp.eq.s32.totalorder %s15, 1
      %p79 = por %p77, %p78
      %p80 = scmp.ne.s32.totalorder %s72, %s75
      %p81 = scmp.eq.s32.totalorder %s15, 0
      %p82 = por %p80, %p81
      %p83 = scmp.ne.s32.totalorder %s72, %s75
      %p84 = scmp.eq.s32.totalorder %s20, 1
      %p85 = por %p83, %p84
      %p86 = scmp.ne.s32.totalorder %s75, %s76
      %p87 = scmp.eq.s32.totalorder %s20, 0
      %p88 = por %p86, %p87
      %p89 = scmp.ne.s32.totalorder %s75, %s76
      %p90 = scmp.eq.s32.totalorder %s21, 1
      %p91 = por %p89, %p90
      %p93 = scmp.ne.s32.totalorder %s76, %s92
      %p94 = scmp.eq.s32.totalorder %s21, 0
      %p95 = por %p93, %p94
      %p96 = scmp.le.s32.totalorder 1, %s15
      %p97 = scmp.lt.s32.totalorder %s15, 3
      %p98 = pnand %p96, %p97
      %p99 = pneg %p98
      // Predicated region
      $region9: #{informed_sender_forward.1} parent=5 // pred_check
        _
      $region10: #{informed_sender_forward.1} parent=5 // pred_check_branch
        %101 = sbr.rel (%p98) target = $region12
      $region11: #{informed_sender_forward.1} parent=5 // pred_region
        %s102 = ssub.s32 %s15, 1
        // Predicated region
        $region13: #{informed_sender_forward.1} parent=11 // pred_check
          %p103 = pneg %p62
        $region14: #{informed_sender_forward.1} parent=11 // pred_check_branch
          %105 = sbr.rel (%p103) target = $region16
        $region15: #{informed_sender_forward.1} parent=11 // pred_region
          %107 = vsyncadd [#allocation6], 0
          %s108 = sshll.u32 %s1, 4
          %s109 = int_to_ptr.hbm [resolvable:$true] %s108
          %s110 = sshll.u32 [#allocation5], 4
          %s111 = int_to_ptr.vmem [resolvable:$true] %s110
          %116 = dma.hbm_to_vmem [thread:$0]  %s109, 1280, %s111, [#allocation6], 128, 128, 8
        $region16: #{informed_sender_forward.1} parent=11 // pred_fallthru
          _
      $region12: #{informed_sender_forward.1} parent=5 // pred_fallthru
        _
      %p117 = scmp.lt.s32.totalorder %s15, 2
      // Predicated region
      $region17: #{informed_sender_forward.1} parent=5 // pred_check
        %p118 = pneg %p117
      $region18: #{informed_sender_forward.1} parent=5 // pred_check_branch
        %120 = sbr.rel (%p118) target = $region20
      $region19: #{informed_sender_forward.1} parent=5 // pred_region
        // Predicated region
        $region21: #{informed_sender_forward.1} parent=19 // pred_check
          %p121 = pneg %p35
        $region22: #{informed_sender_forward.1} parent=19 // pred_check_branch
          %123 = sbr.rel (%p121) target = $region24
        $region23: #{informed_sender_forward.1} parent=19 // pred_region
          %s124 = sand.u32 %s25, 1
          %s125 = scalar_lea.sflag [#allocation3], %s124
          %s126 = sand.u32 %s25, 1
          %s127 = smul.addr %s126, 16
          %s128 = scalar_lea.vmem [#allocation2], %s127
          %s129 = smul.u32 8, %s15
          %131 = vsyncadd %s125, 0
          %s132 = smul.addr %s129, 2
          %s133 = scalar_lea.hbm %s0, %s132
          %s134 = sshll.u32 %s133, 4
          %s135 = int_to_ptr.hbm [resolvable:$true] %s134
          %s136 = sshll.u32 %s128, 4
          %s137 = int_to_ptr.vmem [resolvable:$true] %s136
          %142 = dma.hbm_to_vmem [thread:$0]  %s135, 256, %s137, %s125, 32, 32, 2
        $region24: #{informed_sender_forward.1} parent=19 // pred_fallthru
          _
      $region20: #{informed_sender_forward.1} parent=5 // pred_fallthru
        _
      %p143 = scmp.le.s32.totalorder 1, %s15
      %p144 = scmp.lt.s32.totalorder %s15, 3
      %p145 = pnand %p143, %p144
      %p146 = pneg %p145
      // Predicated region
      $region25: #{informed_sender_forward.1} parent=5 // pred_check
        _
      $region26: #{informed_sender_forward.1} parent=5 // pred_check_branch
        %148 = sbr.rel (%p145) target = $region28
      $region27: #{informed_sender_forward.1} parent=5 // pred_region
        %s149 = ssub.s32 %s15, 1
        %s150 = sand.u32 %s28, 1
        %s151 = scalar_lea.sflag [#allocation3], %s150
        %s152 = sand.u32 %s28, 1
        %s153 = smul.addr %s152, 16
        %s154 = scalar_lea.vmem [#allocation2], %s153
        // Predicated region
        $region29: #{informed_sender_forward.1} parent=27 // pred_check
          %p155 = pneg %p41
        $region30: #{informed_sender_forward.1} parent=27 // pred_check_branch
          %157 = sbr.rel (%p155) target = $region32
        $region31: #{informed_sender_forward.1} parent=27 // pred_region
          %159 = dma.done %s151, 256
        $region32: #{informed_sender_forward.1} parent=27 // pred_fallthru
          _
        // Predicated region
        $region33: #{informed_sender_forward.1} parent=27 // pred_check
          %p160 = pneg %p62
        $region34: #{informed_sender_forward.1} parent=27 // pred_check_branch
          %162 = sbr.rel (%p160) target = $region36
        $region35: #{informed_sender_forward.1} parent=27 // pred_region
          %164 = dma.done [#allocation6], 1280
        $region36: #{informed_sender_forward.1} parent=27 // pred_fallthru
          _
        %s165 = sand.u32 %s28, 1
        %s166 = scalar_lea.sflag [#allocation3], %s165
        %s167 = sand.u32 %s28, 1
        %s168 = smul.addr %s167, 16
        %s169 = scalar_lea.vmem [#allocation2], %s168
        %p170 = pneg %p41
        %p171 = pneg %p38
        %p172 = pneg %p62
        %p173 = pneg %p59
        %p174 = pneg %p88
        %p175 = pneg %p85
        %s176 = sand.u32 %s75, 1
        %s177 = scalar_lea.sflag [#allocation4], %s176
        %s178 = sand.u32 %s75, 1
        %s179 = smul.addr %s178, 8
        %s180 = scalar_lea.vmem [#allocation7], %s179
        %s181 = smul.u32 8, %s20
        %v182 = vld [vmem:[#allocation5] sm:$0xff]
        %v183 = vld [vmem:[#allocation5 + $0x8] sm:$0xff]
        %v184 = vld [vmem:[#allocation5 + $0x10] sm:$0xff]
        %v185 = vld [vmem:[#allocation5 + $0x18] sm:$0xff]
        %v186 = vld [vmem:[#allocation5 + $0x20] sm:$0x1]
        %v187 = vld [vmem:[#allocation5 + $0x21] sm:$0x1]
        %v188 = vld [vmem:[#allocation5 + $0x28] sm:$0x1]
        %v189 = vlaneseq
        %v190 = vand.u32 %v189, 127
        %v191 = vld [vmem:[%s154] sm:$0x3]
        %v192 = vperm.slane %v191, 0
        %v193 = vmul.f32 %v182, %v192
        %v194 = vmul.f32 %v183, %v192
        %v195 = vmul.f32 %v184, %v192
        %v196 = vmul.f32 %v185, %v192
        %vm197 = vcmask 130048
        %v198 = vsel %vm197, %v193, 0.0
        %199 = vadd.xlane.f32.xlu0 %v198
        %v200 = vpop.xlane.xlu0 %199
        %v201 = vsel %vm197, %v194, 0.0
        %202 = vadd.xlane.f32.xlu0 %v201
        %v203 = vpop.xlane.xlu0 %202
        %v204 = vsel %vm197, %v195, 0.0
        %205 = vadd.xlane.f32.xlu0 %v204
        %v206 = vpop.xlane.xlu0 %205
        %v207 = vsel %vm197, %v196, 0.0
        %208 = vadd.xlane.f32.xlu0 %v207
        %v209 = vpop.xlane.xlu0 %208
        %v210 = vperm.slane %v191, 1
        %v211 = vmul.f32 %v182, %v210
        %v212 = vmul.f32 %v183, %v210
        %v213 = vmul.f32 %v184, %v210
        %v214 = vmul.f32 %v185, %v210
        %v215 = vsel %vm197, %v211, 0.0
        %216 = vadd.xlane.f32.xlu0 %v215
        %v217 = vpop.xlane.xlu0 %216
        %v218 = vsel %vm197, %v212, 0.0
        %219 = vadd.xlane.f32.xlu0 %v218
        %v220 = vpop.xlane.xlu0 %219
        %v221 = vsel %vm197, %v213, 0.0
        %222 = vadd.xlane.f32.xlu0 %v221
        %v223 = vpop.xlane.xlu0 %222
        %v224 = vsel %vm197, %v214, 0.0
        %225 = vadd.xlane.f32.xlu0 %v224
        %v226 = vpop.xlane.xlu0 %225
        %v227 = vperm.slane %v186, 0
        %v228 = vmul.f32 %v200, %v227
        %v229 = vmul.f32 %v203, %v227
        %v230 = vmul.f32 %v206, %v227
        %v231 = vmul.f32 %v209, %v227
        %v232 = vperm.slane %v187, 0
        %v233 = vmul.f32 %v217, %v232
        %v234 = vmul.f32 %v220, %v232
        %v235 = vmul.f32 %v223, %v232
        %v236 = vmul.f32 %v226, %v232
        %v237 = vadd.f32 %v228, %v233
        %v238 = vadd.f32 %v229, %v234
        %v239 = vadd.f32 %v230, %v235
        %v240 = vadd.f32 %v231, %v236
        %v241 = vxor.u32 %v237, 2147483648
        %v242 = vxor.u32 %v238, 2147483648
        %v243 = vxor.u32 %v239, 2147483648
        %v244 = vxor.u32 %v240, 2147483648
        %v245 = vmul.f32 %v241, 1.442695
        %v246 = vpow.pop %v245
        %v247 = vmul.f32 %v242, 1.442695
        %v248 = vpow.pop %v247
        %v249 = vmul.f32 %v243, 1.442695
        %v250 = vpow.pop %v249
        %v251 = vmul.f32 %v244, 1.442695
        %v252 = vpow.pop %v251
        %v253 = vadd.f32 %v246, 1.0
        %v254 = vadd.f32 %v248, 1.0
        %v255 = vadd.f32 %v250, 1.0
        %v256 = vadd.f32 %v252, 1.0
        %v257 = vrcp.pop %v253
        %v258 = vmul.f32 %v253, %v257
        %v259 = vsub.f32 1.0, %v258
        %v260 = vmul.f32 %v257, %v259
        %v261 = vadd.f32 %v257, %v260
        %vm262 = vweird.f32 %v253
        %vm263 = vweird.f32 %v257
        %vm264 = vmor %vm262, %vm263
        %v265 = vsel %vm264, %v257, %v261
        %v266 = vand.u32 2147483647, %v253
        %vm267 = vcmp.eq.f32.partialorder %v266, 8.507059e+37
        %v268 = vand.u32 %v253, 2147483648
        %v269 = vor.u32 1.1754944e-38, %v268
        %v270 = vsel %vm267, %v269, %v265
        %v271 = vmul.f32 1.0, %v270
        %v272 = vrcp.pop %v254
        %v273 = vmul.f32 %v254, %v272
        %v274 = vsub.f32 1.0, %v273
        %v275 = vmul.f32 %v272, %v274
        %v276 = vadd.f32 %v272, %v275
        %vm277 = vweird.f32 %v254
        %vm278 = vweird.f32 %v272
        %vm279 = vmor %vm277, %vm278
        %v280 = vsel %vm279, %v272, %v276
        %v281 = vand.u32 2147483647, %v254
        %vm282 = vcmp.eq.f32.partialorder %v281, 8.507059e+37
        %v283 = vand.u32 %v254, 2147483648
        %v284 = vor.u32 1.1754944e-38, %v283
        %v285 = vsel %vm282, %v284, %v280
        %v286 = vmul.f32 1.0, %v285
        %v287 = vrcp.pop %v255
        %v288 = vmul.f32 %v255, %v287
        %v289 = vsub.f32 1.0, %v288
        %v290 = vmul.f32 %v287, %v289
        %v291 = vadd.f32 %v287, %v290
        %vm292 = vweird.f32 %v255
        %vm293 = vweird.f32 %v287
        %vm294 = vmor %vm292, %vm293
        %v295 = vsel %vm294, %v287, %v291
        %v296 = vand.u32 2147483647, %v255
        %vm297 = vcmp.eq.f32.partialorder %v296, 8.507059e+37
        %v298 = vand.u32 %v255, 2147483648
        %v299 = vor.u32 1.1754944e-38, %v298
        %v300 = vsel %vm297, %v299, %v295
        %v301 = vmul.f32 1.0, %v300
        %v302 = vrcp.pop %v256
        %v303 = vmul.f32 %v256, %v302
        %v304 = vsub.f32 1.0, %v303
        %v305 = vmul.f32 %v302, %v304
        %v306 = vadd.f32 %v302, %v305
        %vm307 = vweird.f32 %v256
        %vm308 = vweird.f32 %v302
        %vm309 = vmor %vm307, %vm308
        %v310 = vsel %vm309, %v302, %v306
        %v311 = vand.u32 2147483647, %v256
        %vm312 = vcmp.eq.f32.partialorder %v311, 8.507059e+37
        %v313 = vand.u32 %v256, 2147483648
        %v314 = vor.u32 1.1754944e-38, %v313
        %v315 = vsel %vm312, %v314, %v310
        %v316 = vmul.f32 1.0, %v315
        %v317 = vperm.slane %v188, 0
        %v318 = vmul.f32 %v271, %v317
        %v319 = vmul.f32 %v286, %v317
        %v320 = vmul.f32 %v301, %v317
        %v321 = vmul.f32 %v316, %v317
        %322 = vadd.xlane.f32.xlu0 %v318
        %v323 = vpop.xlane.xlu0 %322
        %324 = vadd.xlane.f32.xlu0 %v319
        %v325 = vpop.xlane.xlu0 %324
        %326 = vadd.xlane.f32.xlu0 %v320
        %v327 = vpop.xlane.xlu0 %326
        %328 = vadd.xlane.f32.xlu0 %v321
        %v329 = vpop.xlane.xlu0 %328
        %v330 = vxor.u32 %v323, 2147483648
        %v331 = vxor.u32 %v325, 2147483648
        %v332 = vxor.u32 %v327, 2147483648
        %v333 = vxor.u32 %v329, 2147483648
        %v334 = vmul.f32 %v330, 1.442695
        %v335 = vpow.pop %v334
        %v336 = vmul.f32 %v331, 1.442695
        %v337 = vpow.pop %v336
        %v338 = vmul.f32 %v332, 1.442695
        %v339 = vpow.pop %v338
        %v340 = vmul.f32 %v333, 1.442695
        %v341 = vpow.pop %v340
        %v342 = vadd.f32 %v335, 1.0
        %v343 = vadd.f32 %v337, 1.0
        %v344 = vadd.f32 %v339, 1.0
        %v345 = vadd.f32 %v341, 1.0
        %v346 = vrcp.pop %v342
        %v347 = vmul.f32 %v342, %v346
        %v348 = vsub.f32 1.0, %v347
        %v349 = vmul.f32 %v346, %v348
        %v350 = vadd.f32 %v346, %v349
        %vm351 = vweird.f32 %v342
        %vm352 = vweird.f32 %v346
        %vm353 = vmor %vm351, %vm352
        %v354 = vsel %vm353, %v346, %v350
        %v355 = vand.u32 2147483647, %v342
        %vm356 = vcmp.eq.f32.partialorder %v355, 8.507059e+37
        %v357 = vand.u32 %v342, 2147483648
        %v358 = vor.u32 1.1754944e-38, %v357
        %v359 = vsel %vm356, %v358, %v354
        %v360 = vmul.f32 1.0, %v359
        %v361 = vrcp.pop %v343
        %v362 = vmul.f32 %v343, %v361
        %v363 = vsub.f32 1.0, %v362
        %v364 = vmul.f32 %v361, %v363
        %v365 = vadd.f32 %v361, %v364
        %vm366 = vweird.f32 %v343
        %vm367 = vweird.f32 %v361
        %vm368 = vmor %vm366, %vm367
        %v369 = vsel %vm368, %v361, %v365
        %v370 = vand.u32 2147483647, %v343
        %vm371 = vcmp.eq.f32.partialorder %v370, 8.507059e+37
        %v372 = vand.u32 %v343, 2147483648
        %v373 = vor.u32 1.1754944e-38, %v372
        %v374 = vsel %vm371, %v373, %v369
        %v375 = vmul.f32 1.0, %v374
        %v376 = vrcp.pop %v344
        %v377 = vmul.f32 %v344, %v376
        %v378 = vsub.f32 1.0, %v377
        %v379 = vmul.f32 %v376, %v378
        %v380 = vadd.f32 %v376, %v379
        %vm381 = vweird.f32 %v344
        %vm382 = vweird.f32 %v376
        %vm383 = vmor %vm381, %vm382
        %v384 = vsel %vm383, %v376, %v380
        %v385 = vand.u32 2147483647, %v344
        %vm386 = vcmp.eq.f32.partialorder %v385, 8.507059e+37
        %v387 = vand.u32 %v344, 2147483648
        %v388 = vor.u32 1.1754944e-38, %v387
        %v389 = vsel %vm386, %v388, %v384
        %v390 = vmul.f32 1.0, %v389
        %v391 = vrcp.pop %v345
        %v392 = vmul.f32 %v345, %v391
        %v393 = vsub.f32 1.0, %v392
        %v394 = vmul.f32 %v391, %v393
        %v395 = vadd.f32 %v391, %v394
        %vm396 = vweird.f32 %v345
        %vm397 = vweird.f32 %v391
        %vm398 = vmor %vm396, %vm397
        %v399 = vsel %vm398, %v391, %v395
        %v400 = vand.u32 2147483647, %v345
        %vm401 = vcmp.eq.f32.partialorder %v400, 8.507059e+37
        %v402 = vand.u32 %v345, 2147483648
        %v403 = vor.u32 1.1754944e-38, %v402
        %v404 = vsel %vm401, %v403, %v399
        %v405 = vmul.f32 1.0, %v404
        %v406 = vld [vmem:[#allocation5 + $0x30] sm:$0xff]
        %v407 = vld [vmem:[#allocation5 + $0x38] sm:$0xff]
        %v408 = vld [vmem:[#allocation5 + $0x40] sm:$0xff]
        %v409 = vld [vmem:[#allocation5 + $0x48] sm:$0xff]
        %v410 = vmul.f32 %v360, %v406
        %v411 = vmul.f32 %v375, %v407
        %v412 = vmul.f32 %v390, %v408
        %v413 = vmul.f32 %v405, %v409
        %v414 = vadd.f32 %v410, %v411
        %v415 = vadd.f32 %v414, %v412
        %v416 = vadd.f32 %v415, %v413
        %v417 = vrot.slane %v416, 4
        %v418 = vadd.f32 %v416, %v417
        %v419 = vrot.slane %v418, 2
        %v420 = vadd.f32 %v418, %v419
        %v421 = vrot.slane %v420, 1
        %v422 = vadd.f32 %v420, %v421
        %vm423 = vcmp.lt.s32.totalorder %v190, 100
        %v424 = vsel %vm423, %v422, -1e+30
        %425 = vmax.xlane.f32.xlu0 %v424
        %v426 = vpop.xlane.xlu0 %425
        %v427 = vsub.f32 %v424, %v426
        %v428 = vmul.f32 %v427, 1.442695
        %v429 = vpow.pop %v428
        %430 = vadd.xlane.f32.xlu0 %v429
        %v431 = vpop.xlane.xlu0 %430
        %v432 = vlog2.pop %v431
        %v433 = vmul.f32 %v432, 0.6931472
        %v434 = vsub.f32 %v427, %v433
        %435 = vst [vmem:[%s180] sm:$0x1] %v434
        %s436 = scalar_lea.vmem %s154, 2 [#allocation2]
        %v437 = vld [vmem:[%s436] sm:$0x3]
        %v438 = vperm.slane %v437, 0
        %v439 = vmul.f32 %v182, %v438
        %v440 = vmul.f32 %v183, %v438
        %v441 = vmul.f32 %v184, %v438
        %v442 = vmul.f32 %v185, %v438
        %v443 = vsel %vm197, %v439, 0.0
        %444 = vadd.xlane.f32.xlu0 %v443
        %v445 = vpop.xlane.xlu0 %444
        %v446 = vsel %vm197, %v440, 0.0
        %447 = vadd.xlane.f32.xlu0 %v446
        %v448 = vpop.xlane.xlu0 %447
        %v449 = vsel %vm197, %v441, 0.0
        %450 = vadd.xlane.f32.xlu0 %v449
        %v451 = vpop.xlane.xlu0 %450
        %v452 = vsel %vm197, %v442, 0.0
        %453 = vadd.xlane.f32.xlu0 %v452
        %v454 = vpop.xlane.xlu0 %453
        %v455 = vperm.slane %v437, 1
        %v456 = vmul.f32 %v182, %v455
        %v457 = vmul.f32 %v183, %v455
        %v458 = vmul.f32 %v184, %v455
        %v459 = vmul.f32 %v185, %v455
        %v460 = vsel %vm197, %v456, 0.0
        %461 = vadd.xlane.f32.xlu0 %v460
        %v462 = vpop.xlane.xlu0 %461
        %v463 = vsel %vm197, %v457, 0.0
        %464 = vadd.xlane.f32.xlu0 %v463
        %v465 = vpop.xlane.xlu0 %464
        %v466 = vsel %vm197, %v458, 0.0
        %467 = vadd.xlane.f32.xlu0 %v466
        %v468 = vpop.xlane.xlu0 %467
        %v469 = vsel %vm197, %v459, 0.0
        %470 = vadd.xlane.f32.xlu0 %v469
        %v471 = vpop.xlane.xlu0 %470
        %v472 = vmul.f32 %v445, %v227
        %v473 = vmul.f32 %v448, %v227
        %v474 = vmul.f32 %v451, %v227
        %v475 = vmul.f32 %v454, %v227
        %v476 = vmul.f32 %v462, %v232
        %v477 = vmul.f32 %v465, %v232
        %v478 = vmul.f32 %v468, %v232
        %v479 = vmul.f32 %v471, %v232
        %v480 = vadd.f32 %v472, %v476
        %v481 = vadd.f32 %v473, %v477
        %v482 = vadd.f32 %v474, %v478
        %v483 = vadd.f32 %v475, %v479
        %v484 = vxor.u32 %v480, 2147483648
        %v485 = vxor.u32 %v481, 2147483648
        %v486 = vxor.u32 %v482, 2147483648
        %v487 = vxor.u32 %v483, 2147483648
        %v488 = vmul.f32 %v484, 1.442695
        %v489 = vpow.pop %v488
        %v490 = vmul.f32 %v485, 1.442695
        %v491 = vpow.pop %v490
        %v492 = vmul.f32 %v486, 1.442695
        %v493 = vpow.pop %v492
        %v494 = vmul.f32 %v487, 1.442695
        %v495 = vpow.pop %v494
        %v496 = vadd.f32 %v489, 1.0
        %v497 = vadd.f32 %v491, 1.0
        %v498 = vadd.f32 %v493, 1.0
        %v499 = vadd.f32 %v495, 1.0
        %v500 = vrcp.pop %v496
        %v501 = vmul.f32 %v496, %v500
        %v502 = vsub.f32 1.0, %v501
        %v503 = vmul.f32 %v500, %v502
        %v504 = vadd.f32 %v500, %v503
        %vm505 = vweird.f32 %v496
        %vm506 = vweird.f32 %v500
        %vm507 = vmor %vm505, %vm506
        %v508 = vsel %vm507, %v500, %v504
        %v509 = vand.u32 2147483647, %v496
        %vm510 = vcmp.eq.f32.partialorder %v509, 8.507059e+37
        %v511 = vand.u32 %v496, 2147483648
        %v512 = vor.u32 1.1754944e-38, %v511
        %v513 = vsel %vm510, %v512, %v508
        %v514 = vmul.f32 1.0, %v513
        %v515 = vrcp.pop %v497
        %v516 = vmul.f32 %v497, %v515
        %v517 = vsub.f32 1.0, %v516
        %v518 = vmul.f32 %v515, %v517
        %v519 = vadd.f32 %v515, %v518
        %vm520 = vweird.f32 %v497
        %vm521 = vweird.f32 %v515
        %vm522 = vmor %vm520, %vm521
        %v523 = vsel %vm522, %v515, %v519
        %v524 = vand.u32 2147483647, %v497
        %vm525 = vcmp.eq.f32.partialorder %v524, 8.507059e+37
        %v526 = vand.u32 %v497, 2147483648
        %v527 = vor.u32 1.1754944e-38, %v526
        %v528 = vsel %vm525, %v527, %v523
        %v529 = vmul.f32 1.0, %v528
        %v530 = vrcp.pop %v498
        %v531 = vmul.f32 %v498, %v530
        %v532 = vsub.f32 1.0, %v531
        %v533 = vmul.f32 %v530, %v532
        %v534 = vadd.f32 %v530, %v533
        %vm535 = vweird.f32 %v498
        %vm536 = vweird.f32 %v530
        %vm537 = vmor %vm535, %vm536
        %v538 = vsel %vm537, %v530, %v534
        %v539 = vand.u32 2147483647, %v498
        %vm540 = vcmp.eq.f32.partialorder %v539, 8.507059e+37
        %v541 = vand.u32 %v498, 2147483648
        %v542 = vor.u32 1.1754944e-38, %v541
        %v543 = vsel %vm540, %v542, %v538
        %v544 = vmul.f32 1.0, %v543
        %v545 = vrcp.pop %v499
        %v546 = vmul.f32 %v499, %v545
        %v547 = vsub.f32 1.0, %v546
        %v548 = vmul.f32 %v545, %v547
        %v549 = vadd.f32 %v545, %v548
        %vm550 = vweird.f32 %v499
        %vm551 = vweird.f32 %v545
        %vm552 = vmor %vm550, %vm551
        %v553 = vsel %vm552, %v545, %v549
        %v554 = vand.u32 2147483647, %v499
        %vm555 = vcmp.eq.f32.partialorder %v554, 8.507059e+37
        %v556 = vand.u32 %v499, 2147483648
        %v557 = vor.u32 1.1754944e-38, %v556
        %v558 = vsel %vm555, %v557, %v553
        %v559 = vmul.f32 1.0, %v558
        %v560 = vmul.f32 %v514, %v317
        %v561 = vmul.f32 %v529, %v317
        %v562 = vmul.f32 %v544, %v317
        %v563 = vmul.f32 %v559, %v317
        %564 = vadd.xlane.f32.xlu0 %v560
        %v565 = vpop.xlane.xlu0 %564
        %566 = vadd.xlane.f32.xlu0 %v561
        %v567 = vpop.xlane.xlu0 %566
        %568 = vadd.xlane.f32.xlu0 %v562
        %v569 = vpop.xlane.xlu0 %568
        %570 = vadd.xlane.f32.xlu0 %v563
        %v571 = vpop.xlane.xlu0 %570
        %v572 = vxor.u32 %v565, 2147483648
        %v573 = vxor.u32 %v567, 2147483648
        %v574 = vxor.u32 %v569, 2147483648
        %v575 = vxor.u32 %v571, 2147483648
        %v576 = vmul.f32 %v572, 1.442695
        %v577 = vpow.pop %v576
        %v578 = vmul.f32 %v573, 1.442695
        %v579 = vpow.pop %v578
        %v580 = vmul.f32 %v574, 1.442695
        %v581 = vpow.pop %v580
        %v582 = vmul.f32 %v575, 1.442695
        %v583 = vpow.pop %v582
        %v584 = vadd.f32 %v577, 1.0
        %v585 = vadd.f32 %v579, 1.0
        %v586 = vadd.f32 %v581, 1.0
        %v587 = vadd.f32 %v583, 1.0
        %v588 = vrcp.pop %v584
        %v589 = vmul.f32 %v584, %v588
        %v590 = vsub.f32 1.0, %v589
        %v591 = vmul.f32 %v588, %v590
        %v592 = vadd.f32 %v588, %v591
        %vm593 = vweird.f32 %v584
        %vm594 = vweird.f32 %v588
        %vm595 = vmor %vm593, %vm594
        %v596 = vsel %vm595, %v588, %v592
        %v597 = vand.u32 2147483647, %v584
        %vm598 = vcmp.eq.f32.partialorder %v597, 8.507059e+37
        %v599 = vand.u32 %v584, 2147483648
        %v600 = vor.u32 1.1754944e-38, %v599
        %v601 = vsel %vm598, %v600, %v596
        %v602 = vmul.f32 1.0, %v601
        %v603 = vrcp.pop %v585
        %v604 = vmul.f32 %v585, %v603
        %v605 = vsub.f32 1.0, %v604
        %v606 = vmul.f32 %v603, %v605
        %v607 = vadd.f32 %v603, %v606
        %vm608 = vweird.f32 %v585
        %vm609 = vweird.f32 %v603
        %vm610 = vmor %vm608, %vm609
        %v611 = vsel %vm610, %v603, %v607
        %v612 = vand.u32 2147483647, %v585
        %vm613 = vcmp.eq.f32.partialorder %v612, 8.507059e+37
        %v614 = vand.u32 %v585, 2147483648
        %v615 = vor.u32 1.1754944e-38, %v614
        %v616 = vsel %vm613, %v615, %v611
        %v617 = vmul.f32 1.0, %v616
        %v618 = vrcp.pop %v586
        %v619 = vmul.f32 %v586, %v618
        %v620 = vsub.f32 1.0, %v619
        %v621 = vmul.f32 %v618, %v620
        %v622 = vadd.f32 %v618, %v621
        %vm623 = vweird.f32 %v586
        %vm624 = vweird.f32 %v618
        %vm625 = vmor %vm623, %vm624
        %v626 = vsel %vm625, %v618, %v622
        %v627 = vand.u32 2147483647, %v586
        %vm628 = vcmp.eq.f32.partialorder %v627, 8.507059e+37
        %v629 = vand.u32 %v586, 2147483648
        %v630 = vor.u32 1.1754944e-38, %v629
        %v631 = vsel %vm628, %v630, %v626
        %v632 = vmul.f32 1.0, %v631
        %v633 = vrcp.pop %v587
        %v634 = vmul.f32 %v587, %v633
        %v635 = vsub.f32 1.0, %v634
        %v636 = vmul.f32 %v633, %v635
        %v637 = vadd.f32 %v633, %v636
        %vm638 = vweird.f32 %v587
        %vm639 = vweird.f32 %v633
        %vm640 = vmor %vm638, %vm639
        %v641 = vsel %vm640, %v633, %v637
        %v642 = vand.u32 2147483647, %v587
        %vm643 = vcmp.eq.f32.partialorder %v642, 8.507059e+37
        %v644 = vand.u32 %v587, 2147483648
        %v645 = vor.u32 1.1754944e-38, %v644
        %v646 = vsel %vm643, %v645, %v641
        %v647 = vmul.f32 1.0, %v646
        %v648 = vld [vmem:[#allocation5 + $0x30] sm:$0xff]
        %v649 = vld [vmem:[#allocation5 + $0x38] sm:$0xff]
        %v650 = vld [vmem:[#allocation5 + $0x40] sm:$0xff]
        %v651 = vld [vmem:[#allocation5 + $0x48] sm:$0xff]
        %v652 = vmul.f32 %v602, %v648
        %v653 = vmul.f32 %v617, %v649
        %v654 = vmul.f32 %v632, %v650
        %v655 = vmul.f32 %v647, %v651
        %v656 = vadd.f32 %v652, %v653
        %v657 = vadd.f32 %v656, %v654
        %v658 = vadd.f32 %v657, %v655
        %v659 = vrot.slane %v658, 4
        %v660 = vadd.f32 %v658, %v659
        %v661 = vrot.slane %v660, 2
        %v662 = vadd.f32 %v660, %v661
        %v663 = vrot.slane %v662, 1
        %v664 = vadd.f32 %v662, %v663
        %v665 = vsel %vm423, %v664, -1e+30
        %666 = vmax.xlane.f32.xlu0 %v665
        %v667 = vpop.xlane.xlu0 %666
        %v668 = vsub.f32 %v665, %v667
        %v669 = vmul.f32 %v668, 1.442695
        %v670 = vpow.pop %v669
        %671 = vadd.xlane.f32.xlu0 %v670
        %v672 = vpop.xlane.xlu0 %671
        %v673 = vlog2.pop %v672
        %v674 = vmul.f32 %v673, 0.6931472
        %v675 = vsub.f32 %v668, %v674
        %676 = vst [vmem:[%s180 + $0x1] sm:$0x1] %v675
        %s677 = scalar_lea.vmem %s154, 4 [#allocation2]
        %v678 = vld [vmem:[%s677] sm:$0x3]
        %v679 = vperm.slane %v678, 0
        %v680 = vmul.f32 %v182, %v679
        %v681 = vmul.f32 %v183, %v679
        %v682 = vmul.f32 %v184, %v679
        %v683 = vmul.f32 %v185, %v679
        %v684 = vsel %vm197, %v680, 0.0
        %685 = vadd.xlane.f32.xlu0 %v684
        %v686 = vpop.xlane.xlu0 %685
        %v687 = vsel %vm197, %v681, 0.0
        %688 = vadd.xlane.f32.xlu0 %v687
        %v689 = vpop.xlane.xlu0 %688
        %v690 = vsel %vm197, %v682, 0.0
        %691 = vadd.xlane.f32.xlu0 %v690
        %v692 = vpop.xlane.xlu0 %691
        %v693 = vsel %vm197, %v683, 0.0
        %694 = vadd.xlane.f32.xlu0 %v693
        %v695 = vpop.xlane.xlu0 %694
        %v696 = vperm.slane %v678, 1
        %v697 = vmul.f32 %v182, %v696
        %v698 = vmul.f32 %v183, %v696
        %v699 = vmul.f32 %v184, %v696
        %v700 = vmul.f32 %v185, %v696
        %v701 = vsel %vm197, %v697, 0.0
        %702 = vadd.xlane.f32.xlu0 %v701
        %v703 = vpop.xlane.xlu0 %702
        %v704 = vsel %vm197, %v698, 0.0
        %705 = vadd.xlane.f32.xlu0 %v704
        %v706 = vpop.xlane.xlu0 %705
        %v707 = vsel %vm197, %v699, 0.0
        %708 = vadd.xlane.f32.xlu0 %v707
        %v709 = vpop.xlane.xlu0 %708
        %v710 = vsel %vm197, %v700, 0.0
        %711 = vadd.xlane.f32.xlu0 %v710
        %v712 = vpop.xlane.xlu0 %711
        %v713 = vmul.f32 %v686, %v227
        %v714 = vmul.f32 %v689, %v227
        %v715 = vmul.f32 %v692, %v227
        %v716 = vmul.f32 %v695, %v227
        %v717 = vmul.f32 %v703, %v232
        %v718 = vmul.f32 %v706, %v232
        %v719 = vmul.f32 %v709, %v232
        %v720 = vmul.f32 %v712, %v232
        %v721 = vadd.f32 %v713, %v717
        %v722 = vadd.f32 %v714, %v718
        %v723 = vadd.f32 %v715, %v719
        %v724 = vadd.f32 %v716, %v720
        %v725 = vxor.u32 %v721, 2147483648
        %v726 = vxor.u32 %v722, 2147483648
        %v727 = vxor.u32 %v723, 2147483648
        %v728 = vxor.u32 %v724, 2147483648
        %v729 = vmul.f32 %v725, 1.442695
        %v730 = vpow.pop %v729
        %v731 = vmul.f32 %v726, 1.442695
        %v732 = vpow.pop %v731
        %v733 = vmul.f32 %v727, 1.442695
        %v734 = vpow.pop %v733
        %v735 = vmul.f32 %v728, 1.442695
        %v736 = vpow.pop %v735
        %v737 = vadd.f32 %v730, 1.0
        %v738 = vadd.f32 %v732, 1.0
        %v739 = vadd.f32 %v734, 1.0
        %v740 = vadd.f32 %v736, 1.0
        %v741 = vrcp.pop %v737
        %v742 = vmul.f32 %v737, %v741
        %v743 = vsub.f32 1.0, %v742
        %v744 = vmul.f32 %v741, %v743
        %v745 = vadd.f32 %v741, %v744
        %vm746 = vweird.f32 %v737
        %vm747 = vweird.f32 %v741
        %vm748 = vmor %vm746, %vm747
        %v749 = vsel %vm748, %v741, %v745
        %v750 = vand.u32 2147483647, %v737
        %vm751 = vcmp.eq.f32.partialorder %v750, 8.507059e+37
        %v752 = vand.u32 %v737, 2147483648
        %v753 = vor.u32 1.1754944e-38, %v752
        %v754 = vsel %vm751, %v753, %v749
        %v755 = vmul.f32 1.0, %v754
        %v756 = vrcp.pop %v738
        %v757 = vmul.f32 %v738, %v756
        %v758 = vsub.f32 1.0, %v757
        %v759 = vmul.f32 %v756, %v758
        %v760 = vadd.f32 %v756, %v759
        %vm761 = vweird.f32 %v738
        %vm762 = vweird.f32 %v756
        %vm763 = vmor %vm761, %vm762
        %v764 = vsel %vm763, %v756, %v760
        %v765 = vand.u32 2147483647, %v738
        %vm766 = vcmp.eq.f32.partialorder %v765, 8.507059e+37
        %v767 = vand.u32 %v738, 2147483648
        %v768 = vor.u32 1.1754944e-38, %v767
        %v769 = vsel %vm766, %v768, %v764
        %v770 = vmul.f32 1.0, %v769
        %v771 = vrcp.pop %v739
        %v772 = vmul.f32 %v739, %v771
        %v773 = vsub.f32 1.0, %v772
        %v774 = vmul.f32 %v771, %v773
        %v775 = vadd.f32 %v771, %v774
        %vm776 = vweird.f32 %v739
        %vm777 = vweird.f32 %v771
        %vm778 = vmor %vm776, %vm777
        %v779 = vsel %vm778, %v771, %v775
        %v780 = vand.u32 2147483647, %v739
        %vm781 = vcmp.eq.f32.partialorder %v780, 8.507059e+37
        %v782 = vand.u32 %v739, 2147483648
        %v783 = vor.u32 1.1754944e-38, %v782
        %v784 = vsel %vm781, %v783, %v779
        %v785 = vmul.f32 1.0, %v784
        %v786 = vrcp.pop %v740
        %v787 = vmul.f32 %v740, %v786
        %v788 = vsub.f32 1.0, %v787
        %v789 = vmul.f32 %v786, %v788
        %v790 = vadd.f32 %v786, %v789
        %vm791 = vweird.f32 %v740
        %vm792 = vweird.f32 %v786
        %vm793 = vmor %vm791, %vm792
        %v794 = vsel %vm793, %v786, %v790
        %v795 = vand.u32 2147483647, %v740
        %vm796 = vcmp.eq.f32.partialorder %v795, 8.507059e+37
        %v797 = vand.u32 %v740, 2147483648
        %v798 = vor.u32 1.1754944e-38, %v797
        %v799 = vsel %vm796, %v798, %v794
        %v800 = vmul.f32 1.0, %v799
        %v801 = vmul.f32 %v755, %v317
        %v802 = vmul.f32 %v770, %v317
        %v803 = vmul.f32 %v785, %v317
        %v804 = vmul.f32 %v800, %v317
        %805 = vadd.xlane.f32.xlu0 %v801
        %v806 = vpop.xlane.xlu0 %805
        %807 = vadd.xlane.f32.xlu0 %v802
        %v808 = vpop.xlane.xlu0 %807
        %809 = vadd.xlane.f32.xlu0 %v803
        %v810 = vpop.xlane.xlu0 %809
        %811 = vadd.xlane.f32.xlu0 %v804
        %v812 = vpop.xlane.xlu0 %811
        %v813 = vxor.u32 %v806, 2147483648
        %v814 = vxor.u32 %v808, 2147483648
        %v815 = vxor.u32 %v810, 2147483648
        %v816 = vxor.u32 %v812, 2147483648
        %v817 = vmul.f32 %v813, 1.442695
        %v818 = vpow.pop %v817
        %v819 = vmul.f32 %v814, 1.442695
        %v820 = vpow.pop %v819
        %v821 = vmul.f32 %v815, 1.442695
        %v822 = vpow.pop %v821
        %v823 = vmul.f32 %v816, 1.442695
        %v824 = vpow.pop %v823
        %v825 = vadd.f32 %v818, 1.0
        %v826 = vadd.f32 %v820, 1.0
        %v827 = vadd.f32 %v822, 1.0
        %v828 = vadd.f32 %v824, 1.0
        %v829 = vrcp.pop %v825
        %v830 = vmul.f32 %v825, %v829
        %v831 = vsub.f32 1.0, %v830
        %v832 = vmul.f32 %v829, %v831
        %v833 = vadd.f32 %v829, %v832
        %vm834 = vweird.f32 %v825
        %vm835 = vweird.f32 %v829
        %vm836 = vmor %vm834, %vm835
        %v837 = vsel %vm836, %v829, %v833
        %v838 = vand.u32 2147483647, %v825
        %vm839 = vcmp.eq.f32.partialorder %v838, 8.507059e+37
        %v840 = vand.u32 %v825, 2147483648
        %v841 = vor.u32 1.1754944e-38, %v840
        %v842 = vsel %vm839, %v841, %v837
        %v843 = vmul.f32 1.0, %v842
        %v844 = vrcp.pop %v826
        %v845 = vmul.f32 %v826, %v844
        %v846 = vsub.f32 1.0, %v845
        %v847 = vmul.f32 %v844, %v846
        %v848 = vadd.f32 %v844, %v847
        %vm849 = vweird.f32 %v826
        %vm850 = vweird.f32 %v844
        %vm851 = vmor %vm849, %vm850
        %v852 = vsel %vm851, %v844, %v848
        %v853 = vand.u32 2147483647, %v826
        %vm854 = vcmp.eq.f32.partialorder %v853, 8.507059e+37
        %v855 = vand.u32 %v826, 2147483648
        %v856 = vor.u32 1.1754944e-38, %v855
        %v857 = vsel %vm854, %v856, %v852
        %v858 = vmul.f32 1.0, %v857
        %v859 = vrcp.pop %v827
        %v860 = vmul.f32 %v827, %v859
        %v861 = vsub.f32 1.0, %v860
        %v862 = vmul.f32 %v859, %v861
        %v863 = vadd.f32 %v859, %v862
        %vm864 = vweird.f32 %v827
        %vm865 = vweird.f32 %v859
        %vm866 = vmor %vm864, %vm865
        %v867 = vsel %vm866, %v859, %v863
        %v868 = vand.u32 2147483647, %v827
        %vm869 = vcmp.eq.f32.partialorder %v868, 8.507059e+37
        %v870 = vand.u32 %v827, 2147483648
        %v871 = vor.u32 1.1754944e-38, %v870
        %v872 = vsel %vm869, %v871, %v867
        %v873 = vmul.f32 1.0, %v872
        %v874 = vrcp.pop %v828
        %v875 = vmul.f32 %v828, %v874
        %v876 = vsub.f32 1.0, %v875
        %v877 = vmul.f32 %v874, %v876
        %v878 = vadd.f32 %v874, %v877
        %vm879 = vweird.f32 %v828
        %vm880 = vweird.f32 %v874
        %vm881 = vmor %vm879, %vm880
        %v882 = vsel %vm881, %v874, %v878
        %v883 = vand.u32 2147483647, %v828
        %vm884 = vcmp.eq.f32.partialorder %v883, 8.507059e+37
        %v885 = vand.u32 %v828, 2147483648
        %v886 = vor.u32 1.1754944e-38, %v885
        %v887 = vsel %vm884, %v886, %v882
        %v888 = vmul.f32 1.0, %v887
        %v889 = vld [vmem:[#allocation5 + $0x30] sm:$0xff]
        %v890 = vld [vmem:[#allocation5 + $0x38] sm:$0xff]
        %v891 = vld [vmem:[#allocation5 + $0x40] sm:$0xff]
        %v892 = vld [vmem:[#allocation5 + $0x48] sm:$0xff]
        %v893 = vmul.f32 %v843, %v889
        %v894 = vmul.f32 %v858, %v890
        %v895 = vmul.f32 %v873, %v891
        %v896 = vmul.f32 %v888, %v892
        %v897 = vadd.f32 %v893, %v894
        %v898 = vadd.f32 %v897, %v895
        %v899 = vadd.f32 %v898, %v896
        %v900 = vrot.slane %v899, 4
        %v901 = vadd.f32 %v899, %v900
        %v902 = vrot.slane %v901, 2
        %v903 = vadd.f32 %v901, %v902
        %v904 = vrot.slane %v903, 1
        %v905 = vadd.f32 %v903, %v904
        %v906 = vsel %vm423, %v905, -1e+30
        %907 = vmax.xlane.f32.xlu0 %v906
        %v908 = vpop.xlane.xlu0 %907
        %v909 = vsub.f32 %v906, %v908
        %v910 = vmul.f32 %v909, 1.442695
        %v911 = vpow.pop %v910
        %912 = vadd.xlane.f32.xlu0 %v911
        %v913 = vpop.xlane.xlu0 %912
        %v914 = vlog2.pop %v913
        %v915 = vmul.f32 %v914, 0.6931472
        %v916 = vsub.f32 %v909, %v915
        %917 = vst [vmem:[%s180 + $0x2] sm:$0x1] %v916
        %s918 = scalar_lea.vmem %s154, 6 [#allocation2]
        %v919 = vld [vmem:[%s918] sm:$0x3]
        %v920 = vperm.slane %v919, 0
        %v921 = vmul.f32 %v182, %v920
        %v922 = vmul.f32 %v183, %v920
        %v923 = vmul.f32 %v184, %v920
        %v924 = vmul.f32 %v185, %v920
        %v925 = vsel %vm197, %v921, 0.0
        %926 = vadd.xlane.f32.xlu0 %v925
        %v927 = vpop.xlane.xlu0 %926
        %v928 = vsel %vm197, %v922, 0.0
        %929 = vadd.xlane.f32.xlu0 %v928
        %v930 = vpop.xlane.xlu0 %929
        %v931 = vsel %vm197, %v923, 0.0
        %932 = vadd.xlane.f32.xlu0 %v931
        %v933 = vpop.xlane.xlu0 %932
        %v934 = vsel %vm197, %v924, 0.0
        %935 = vadd.xlane.f32.xlu0 %v934
        %v936 = vpop.xlane.xlu0 %935
        %v937 = vperm.slane %v919, 1
        %v938 = vmul.f32 %v182, %v937
        %v939 = vmul.f32 %v183, %v937
        %v940 = vmul.f32 %v184, %v937
        %v941 = vmul.f32 %v185, %v937
        %v942 = vsel %vm197, %v938, 0.0
        %943 = vadd.xlane.f32.xlu0 %v942
        %v944 = vpop.xlane.xlu0 %943
        %v945 = vsel %vm197, %v939, 0.0
        %946 = vadd.xlane.f32.xlu0 %v945
        %v947 = vpop.xlane.xlu0 %946
        %v948 = vsel %vm197, %v940, 0.0
        %949 = vadd.xlane.f32.xlu0 %v948
        %v950 = vpop.xlane.xlu0 %949
        %v951 = vsel %vm197, %v941, 0.0
        %952 = vadd.xlane.f32.xlu0 %v951
        %v953 = vpop.xlane.xlu0 %952
        %v954 = vmul.f32 %v927, %v227
        %v955 = vmul.f32 %v930, %v227
        %v956 = vmul.f32 %v933, %v227
        %v957 = vmul.f32 %v936, %v227
        %v958 = vmul.f32 %v944, %v232
        %v959 = vmul.f32 %v947, %v232
        %v960 = vmul.f32 %v950, %v232
        %v961 = vmul.f32 %v953, %v232
        %v962 = vadd.f32 %v954, %v958
        %v963 = vadd.f32 %v955, %v959
        %v964 = vadd.f32 %v956, %v960
        %v965 = vadd.f32 %v957, %v961
        %v966 = vxor.u32 %v962, 2147483648
        %v967 = vxor.u32 %v963, 2147483648
        %v968 = vxor.u32 %v964, 2147483648
        %v969 = vxor.u32 %v965, 2147483648
        %v970 = vmul.f32 %v966, 1.442695
        %v971 = vpow.pop %v970
        %v972 = vmul.f32 %v967, 1.442695
        %v973 = vpow.pop %v972
        %v974 = vmul.f32 %v968, 1.442695
        %v975 = vpow.pop %v974
        %v976 = vmul.f32 %v969, 1.442695
        %v977 = vpow.pop %v976
        %v978 = vadd.f32 %v971, 1.0
        %v979 = vadd.f32 %v973, 1.0
        %v980 = vadd.f32 %v975, 1.0
        %v981 = vadd.f32 %v977, 1.0
        %v982 = vrcp.pop %v978
        %v983 = vmul.f32 %v978, %v982
        %v984 = vsub.f32 1.0, %v983
        %v985 = vmul.f32 %v982, %v984
        %v986 = vadd.f32 %v982, %v985
        %vm987 = vweird.f32 %v978
        %vm988 = vweird.f32 %v982
        %vm989 = vmor %vm987, %vm988
        %v990 = vsel %vm989, %v982, %v986
        %v991 = vand.u32 2147483647, %v978
        %vm992 = vcmp.eq.f32.partialorder %v991, 8.507059e+37
        %v993 = vand.u32 %v978, 2147483648
        %v994 = vor.u32 1.1754944e-38, %v993
        %v995 = vsel %vm992, %v994, %v990
        %v996 = vmul.f32 1.0, %v995
        %v997 = vrcp.pop %v979
        %v998 = vmul.f32 %v979, %v997
        %v999 = vsub.f32 1.0, %v998
        %v1000 = vmul.f32 %v997, %v999
        %v1001 = vadd.f32 %v997, %v1000
        %vm1002 = vweird.f32 %v979
        %vm1003 = vweird.f32 %v997
        %vm1004 = vmor %vm1002, %vm1003
        %v1005 = vsel %vm1004, %v997, %v1001
        %v1006 = vand.u32 2147483647, %v979
        %vm1007 = vcmp.eq.f32.partialorder %v1006, 8.507059e+37
        %v1008 = vand.u32 %v979, 2147483648
        %v1009 = vor.u32 1.1754944e-38, %v1008
        %v1010 = vsel %vm1007, %v1009, %v1005
        %v1011 = vmul.f32 1.0, %v1010
        %v1012 = vrcp.pop %v980
        %v1013 = vmul.f32 %v980, %v1012
        %v1014 = vsub.f32 1.0, %v1013
        %v1015 = vmul.f32 %v1012, %v1014
        %v1016 = vadd.f32 %v1012, %v1015
        %vm1017 = vweird.f32 %v980
        %vm1018 = vweird.f32 %v1012
        %vm1019 = vmor %vm1017, %vm1018
        %v1020 = vsel %vm1019, %v1012, %v1016
        %v1021 = vand.u32 2147483647, %v980
        %vm1022 = vcmp.eq.f32.partialorder %v1021, 8.507059e+37
        %v1023 = vand.u32 %v980, 2147483648
        %v1024 = vor.u32 1.1754944e-38, %v1023
        %v1025 = vsel %vm1022, %v1024, %v1020
        %v1026 = vmul.f32 1.0, %v1025
        %v1027 = vrcp.pop %v981
        %v1028 = vmul.f32 %v981, %v1027
        %v1029 = vsub.f32 1.0, %v1028
        %v1030 = vmul.f32 %v1027, %v1029
        %v1031 = vadd.f32 %v1027, %v1030
        %vm1032 = vweird.f32 %v981
        %vm1033 = vweird.f32 %v1027
        %vm1034 = vmor %vm1032, %vm1033
        %v1035 = vsel %vm1034, %v1027, %v1031
        %v1036 = vand.u32 2147483647, %v981
        %vm1037 = vcmp.eq.f32.partialorder %v1036, 8.507059e+37
        %v1038 = vand.u32 %v981, 2147483648
        %v1039 = vor.u32 1.1754944e-38, %v1038
        %v1040 = vsel %vm1037, %v1039, %v1035
        %v1041 = vmul.f32 1.0, %v1040
        %v1042 = vmul.f32 %v996, %v317
        %v1043 = vmul.f32 %v1011, %v317
        %v1044 = vmul.f32 %v1026, %v317
        %v1045 = vmul.f32 %v1041, %v317
        %1046 = vadd.xlane.f32.xlu0 %v1042
        %v1047 = vpop.xlane.xlu0 %1046
        %1048 = vadd.xlane.f32.xlu0 %v1043
        %v1049 = vpop.xlane.xlu0 %1048
        %1050 = vadd.xlane.f32.xlu0 %v1044
        %v1051 = vpop.xlane.xlu0 %1050
        %1052 = vadd.xlane.f32.xlu0 %v1045
        %v1053 = vpop.xlane.xlu0 %1052
        %v1054 = vxor.u32 %v1047, 2147483648
        %v1055 = vxor.u32 %v1049, 2147483648
        %v1056 = vxor.u32 %v1051, 2147483648
        %v1057 = vxor.u32 %v1053, 2147483648
        %v1058 = vmul.f32 %v1054, 1.442695
        %v1059 = vpow.pop %v1058
        %v1060 = vmul.f32 %v1055, 1.442695
        %v1061 = vpow.pop %v1060
        %v1062 = vmul.f32 %v1056, 1.442695
        %v1063 = vpow.pop %v1062
        %v1064 = vmul.f32 %v1057, 1.442695
        %v1065 = vpow.pop %v1064
        %v1066 = vadd.f32 %v1059, 1.0
        %v1067 = vadd.f32 %v1061, 1.0
        %v1068 = vadd.f32 %v1063, 1.0
        %v1069 = vadd.f32 %v1065, 1.0
        %v1070 = vrcp.pop %v1066
        %v1071 = vmul.f32 %v1066, %v1070
        %v1072 = vsub.f32 1.0, %v1071
        %v1073 = vmul.f32 %v1070, %v1072
        %v1074 = vadd.f32 %v1070, %v1073
        %vm1075 = vweird.f32 %v1066
        %vm1076 = vweird.f32 %v1070
        %vm1077 = vmor %vm1075, %vm1076
        %v1078 = vsel %vm1077, %v1070, %v1074
        %v1079 = vand.u32 2147483647, %v1066
        %vm1080 = vcmp.eq.f32.partialorder %v1079, 8.507059e+37
        %v1081 = vand.u32 %v1066, 2147483648
        %v1082 = vor.u32 1.1754944e-38, %v1081
        %v1083 = vsel %vm1080, %v1082, %v1078
        %v1084 = vmul.f32 1.0, %v1083
        %v1085 = vrcp.pop %v1067
        %v1086 = vmul.f32 %v1067, %v1085
        %v1087 = vsub.f32 1.0, %v1086
        %v1088 = vmul.f32 %v1085, %v1087
        %v1089 = vadd.f32 %v1085, %v1088
        %vm1090 = vweird.f32 %v1067
        %vm1091 = vweird.f32 %v1085
        %vm1092 = vmor %vm1090, %vm1091
        %v1093 = vsel %vm1092, %v1085, %v1089
        %v1094 = vand.u32 2147483647, %v1067
        %vm1095 = vcmp.eq.f32.partialorder %v1094, 8.507059e+37
        %v1096 = vand.u32 %v1067, 2147483648
        %v1097 = vor.u32 1.1754944e-38, %v1096
        %v1098 = vsel %vm1095, %v1097, %v1093
        %v1099 = vmul.f32 1.0, %v1098
        %v1100 = vrcp.pop %v1068
        %v1101 = vmul.f32 %v1068, %v1100
        %v1102 = vsub.f32 1.0, %v1101
        %v1103 = vmul.f32 %v1100, %v1102
        %v1104 = vadd.f32 %v1100, %v1103
        %vm1105 = vweird.f32 %v1068
        %vm1106 = vweird.f32 %v1100
        %vm1107 = vmor %vm1105, %vm1106
        %v1108 = vsel %vm1107, %v1100, %v1104
        %v1109 = vand.u32 2147483647, %v1068
        %vm1110 = vcmp.eq.f32.partialorder %v1109, 8.507059e+37
        %v1111 = vand.u32 %v1068, 2147483648
        %v1112 = vor.u32 1.1754944e-38, %v1111
        %v1113 = vsel %vm1110, %v1112, %v1108
        %v1114 = vmul.f32 1.0, %v1113
        %v1115 = vrcp.pop %v1069
        %v1116 = vmul.f32 %v1069, %v1115
        %v1117 = vsub.f32 1.0, %v1116
        %v1118 = vmul.f32 %v1115, %v1117
        %v1119 = vadd.f32 %v1115, %v1118
        %vm1120 = vweird.f32 %v1069
        %vm1121 = vweird.f32 %v1115
        %vm1122 = vmor %vm1120, %vm1121
        %v1123 = vsel %vm1122, %v1115, %v1119
        %v1124 = vand.u32 2147483647, %v1069
        %vm1125 = vcmp.eq.f32.partialorder %v1124, 8.507059e+37
        %v1126 = vand.u32 %v1069, 2147483648
        %v1127 = vor.u32 1.1754944e-38, %v1126
        %v1128 = vsel %vm1125, %v1127, %v1123
        %v1129 = vmul.f32 1.0, %v1128
        %v1130 = vld [vmem:[#allocation5 + $0x30] sm:$0xff]
        %v1131 = vld [vmem:[#allocation5 + $0x38] sm:$0xff]
        %v1132 = vld [vmem:[#allocation5 + $0x40] sm:$0xff]
        %v1133 = vld [vmem:[#allocation5 + $0x48] sm:$0xff]
        %v1134 = vmul.f32 %v1084, %v1130
        %v1135 = vmul.f32 %v1099, %v1131
        %v1136 = vmul.f32 %v1114, %v1132
        %v1137 = vmul.f32 %v1129, %v1133
        %v1138 = vadd.f32 %v1134, %v1135
        %v1139 = vadd.f32 %v1138, %v1136
        %v1140 = vadd.f32 %v1139, %v1137
        %v1141 = vrot.slane %v1140, 4
        %v1142 = vadd.f32 %v1140, %v1141
        %v1143 = vrot.slane %v1142, 2
        %v1144 = vadd.f32 %v1142, %v1143
        %v1145 = vrot.slane %v1144, 1
        %v1146 = vadd.f32 %v1144, %v1145
        %v1147 = vsel %vm423, %v1146, -1e+30
        %1148 = vmax.xlane.f32.xlu0 %v1147
        %v1149 = vpop.xlane.xlu0 %1148
        %v1150 = vsub.f32 %v1147, %v1149
        %v1151 = vmul.f32 %v1150, 1.442695
        %v1152 = vpow.pop %v1151
        %1153 = vadd.xlane.f32.xlu0 %v1152
        %v1154 = vpop.xlane.xlu0 %1153
        %v1155 = vlog2.pop %v1154
        %v1156 = vmul.f32 %v1155, 0.6931472
        %v1157 = vsub.f32 %v1150, %v1156
        %1158 = vst [vmem:[%s180 + $0x3] sm:$0x1] %v1157
        %s1159 = scalar_lea.vmem %s154, 8 [#allocation2]
        %v1160 = vld [vmem:[%s1159] sm:$0x3]
        %v1161 = vperm.slane %v1160, 0
        %v1162 = vmul.f32 %v182, %v1161
        %v1163 = vmul.f32 %v183, %v1161
        %v1164 = vmul.f32 %v184, %v1161
        %v1165 = vmul.f32 %v185, %v1161
        %v1166 = vsel %vm197, %v1162, 0.0
        %1167 = vadd.xlane.f32.xlu0 %v1166
        %v1168 = vpop.xlane.xlu0 %1167
        %v1169 = vsel %vm197, %v1163, 0.0
        %1170 = vadd.xlane.f32.xlu0 %v1169
        %v1171 = vpop.xlane.xlu0 %1170
        %v1172 = vsel %vm197, %v1164, 0.0
        %1173 = vadd.xlane.f32.xlu0 %v1172
        %v1174 = vpop.xlane.xlu0 %1173
        %v1175 = vsel %vm197, %v1165, 0.0
        %1176 = vadd.xlane.f32.xlu0 %v1175
        %v1177 = vpop.xlane.xlu0 %1176
        %v1178 = vperm.slane %v1160, 1
        %v1179 = vmul.f32 %v182, %v1178
        %v1180 = vmul.f32 %v183, %v1178
        %v1181 = vmul.f32 %v184, %v1178
        %v1182 = vmul.f32 %v185, %v1178
        %v1183 = vsel %vm197, %v1179, 0.0
        %1184 = vadd.xlane.f32.xlu0 %v1183
        %v1185 = vpop.xlane.xlu0 %1184
        %v1186 = vsel %vm197, %v1180, 0.0
        %1187 = vadd.xlane.f32.xlu0 %v1186
        %v1188 = vpop.xlane.xlu0 %1187
        %v1189 = vsel %vm197, %v1181, 0.0
        %1190 = vadd.xlane.f32.xlu0 %v1189
        %v1191 = vpop.xlane.xlu0 %1190
        %v1192 = vsel %vm197, %v1182, 0.0
        %1193 = vadd.xlane.f32.xlu0 %v1192
        %v1194 = vpop.xlane.xlu0 %1193
        %v1195 = vmul.f32 %v1168, %v227
        %v1196 = vmul.f32 %v1171, %v227
        %v1197 = vmul.f32 %v1174, %v227
        %v1198 = vmul.f32 %v1177, %v227
        %v1199 = vmul.f32 %v1185, %v232
        %v1200 = vmul.f32 %v1188, %v232
        %v1201 = vmul.f32 %v1191, %v232
        %v1202 = vmul.f32 %v1194, %v232
        %v1203 = vadd.f32 %v1195, %v1199
        %v1204 = vadd.f32 %v1196, %v1200
        %v1205 = vadd.f32 %v1197, %v1201
        %v1206 = vadd.f32 %v1198, %v1202
        %v1207 = vxor.u32 %v1203, 2147483648
        %v1208 = vxor.u32 %v1204, 2147483648
        %v1209 = vxor.u32 %v1205, 2147483648
        %v1210 = vxor.u32 %v1206, 2147483648
        %v1211 = vmul.f32 %v1207, 1.442695
        %v1212 = vpow.pop %v1211
        %v1213 = vmul.f32 %v1208, 1.442695
        %v1214 = vpow.pop %v1213
        %v1215 = vmul.f32 %v1209, 1.442695
        %v1216 = vpow.pop %v1215
        %v1217 = vmul.f32 %v1210, 1.442695
        %v1218 = vpow.pop %v1217
        %v1219 = vadd.f32 %v1212, 1.0
        %v1220 = vadd.f32 %v1214, 1.0
        %v1221 = vadd.f32 %v1216, 1.0
        %v1222 = vadd.f32 %v1218, 1.0
        %v1223 = vrcp.pop %v1219
        %v1224 = vmul.f32 %v1219, %v1223
        %v1225 = vsub.f32 1.0, %v1224
        %v1226 = vmul.f32 %v1223, %v1225
        %v1227 = vadd.f32 %v1223, %v1226
        %vm1228 = vweird.f32 %v1219
        %vm1229 = vweird.f32 %v1223
        %vm1230 = vmor %vm1228, %vm1229
        %v1231 = vsel %vm1230, %v1223, %v1227
        %v1232 = vand.u32 2147483647, %v1219
        %vm1233 = vcmp.eq.f32.partialorder %v1232, 8.507059e+37
        %v1234 = vand.u32 %v1219, 2147483648
        %v1235 = vor.u32 1.1754944e-38, %v1234
        %v1236 = vsel %vm1233, %v1235, %v1231
        %v1237 = vmul.f32 1.0, %v1236
        %v1238 = vrcp.pop %v1220
        %v1239 = vmul.f32 %v1220, %v1238
        %v1240 = vsub.f32 1.0, %v1239
        %v1241 = vmul.f32 %v1238, %v1240
        %v1242 = vadd.f32 %v1238, %v1241
        %vm1243 = vweird.f32 %v1220
        %vm1244 = vweird.f32 %v1238
        %vm1245 = vmor %vm1243, %vm1244
        %v1246 = vsel %vm1245, %v1238, %v1242
        %v1247 = vand.u32 2147483647, %v1220
        %vm1248 = vcmp.eq.f32.partialorder %v1247, 8.507059e+37
        %v1249 = vand.u32 %v1220, 2147483648
        %v1250 = vor.u32 1.1754944e-38, %v1249
        %v1251 = vsel %vm1248, %v1250, %v1246
        %v1252 = vmul.f32 1.0, %v1251
        %v1253 = vrcp.pop %v1221
        %v1254 = vmul.f32 %v1221, %v1253
        %v1255 = vsub.f32 1.0, %v1254
        %v1256 = vmul.f32 %v1253, %v1255
        %v1257 = vadd.f32 %v1253, %v1256
        %vm1258 = vweird.f32 %v1221
        %vm1259 = vweird.f32 %v1253
        %vm1260 = vmor %vm1258, %vm1259
        %v1261 = vsel %vm1260, %v1253, %v1257
        %v1262 = vand.u32 2147483647, %v1221
        %vm1263 = vcmp.eq.f32.partialorder %v1262, 8.507059e+37
        %v1264 = vand.u32 %v1221, 2147483648
        %v1265 = vor.u32 1.1754944e-38, %v1264
        %v1266 = vsel %vm1263, %v1265, %v1261
        %v1267 = vmul.f32 1.0, %v1266
        %v1268 = vrcp.pop %v1222
        %v1269 = vmul.f32 %v1222, %v1268
        %v1270 = vsub.f32 1.0, %v1269
        %v1271 = vmul.f32 %v1268, %v1270
        %v1272 = vadd.f32 %v1268, %v1271
        %vm1273 = vweird.f32 %v1222
        %vm1274 = vweird.f32 %v1268
        %vm1275 = vmor %vm1273, %vm1274
        %v1276 = vsel %vm1275, %v1268, %v1272
        %v1277 = vand.u32 2147483647, %v1222
        %vm1278 = vcmp.eq.f32.partialorder %v1277, 8.507059e+37
        %v1279 = vand.u32 %v1222, 2147483648
        %v1280 = vor.u32 1.1754944e-38, %v1279
        %v1281 = vsel %vm1278, %v1280, %v1276
        %v1282 = vmul.f32 1.0, %v1281
        %v1283 = vmul.f32 %v1237, %v317
        %v1284 = vmul.f32 %v1252, %v317
        %v1285 = vmul.f32 %v1267, %v317
        %v1286 = vmul.f32 %v1282, %v317
        %1287 = vadd.xlane.f32.xlu0 %v1283
        %v1288 = vpop.xlane.xlu0 %1287
        %1289 = vadd.xlane.f32.xlu0 %v1284
        %v1290 = vpop.xlane.xlu0 %1289
        %1291 = vadd.xlane.f32.xlu0 %v1285
        %v1292 = vpop.xlane.xlu0 %1291
        %1293 = vadd.xlane.f32.xlu0 %v1286
        %v1294 = vpop.xlane.xlu0 %1293
        %v1295 = vxor.u32 %v1288, 2147483648
        %v1296 = vxor.u32 %v1290, 2147483648
        %v1297 = vxor.u32 %v1292, 2147483648
        %v1298 = vxor.u32 %v1294, 2147483648
        %v1299 = vmul.f32 %v1295, 1.442695
        %v1300 = vpow.pop %v1299
        %v1301 = vmul.f32 %v1296, 1.442695
        %v1302 = vpow.pop %v1301
        %v1303 = vmul.f32 %v1297, 1.442695
        %v1304 = vpow.pop %v1303
        %v1305 = vmul.f32 %v1298, 1.442695
        %v1306 = vpow.pop %v1305
        %v1307 = vadd.f32 %v1300, 1.0
        %v1308 = vadd.f32 %v1302, 1.0
        %v1309 = vadd.f32 %v1304, 1.0
        %v1310 = vadd.f32 %v1306, 1.0
        %v1311 = vrcp.pop %v1307
        %v1312 = vmul.f32 %v1307, %v1311
        %v1313 = vsub.f32 1.0, %v1312
        %v1314 = vmul.f32 %v1311, %v1313
        %v1315 = vadd.f32 %v1311, %v1314
        %vm1316 = vweird.f32 %v1307
        %vm1317 = vweird.f32 %v1311
        %vm1318 = vmor %vm1316, %vm1317
        %v1319 = vsel %vm1318, %v1311, %v1315
        %v1320 = vand.u32 2147483647, %v1307
        %vm1321 = vcmp.eq.f32.partialorder %v1320, 8.507059e+37
        %v1322 = vand.u32 %v1307, 2147483648
        %v1323 = vor.u32 1.1754944e-38, %v1322
        %v1324 = vsel %vm1321, %v1323, %v1319
        %v1325 = vmul.f32 1.0, %v1324
        %v1326 = vrcp.pop %v1308
        %v1327 = vmul.f32 %v1308, %v1326
        %v1328 = vsub.f32 1.0, %v1327
        %v1329 = vmul.f32 %v1326, %v1328
        %v1330 = vadd.f32 %v1326, %v1329
        %vm1331 = vweird.f32 %v1308
        %vm1332 = vweird.f32 %v1326
        %vm1333 = vmor %vm1331, %vm1332
        %v1334 = vsel %vm1333, %v1326, %v1330
        %v1335 = vand.u32 2147483647, %v1308
        %vm1336 = vcmp.eq.f32.partialorder %v1335, 8.507059e+37
        %v1337 = vand.u32 %v1308, 2147483648
        %v1338 = vor.u32 1.1754944e-38, %v1337
        %v1339 = vsel %vm1336, %v1338, %v1334
        %v1340 = vmul.f32 1.0, %v1339
        %v1341 = vrcp.pop %v1309
        %v1342 = vmul.f32 %v1309, %v1341
        %v1343 = vsub.f32 1.0, %v1342
        %v1344 = vmul.f32 %v1341, %v1343
        %v1345 = vadd.f32 %v1341, %v1344
        %vm1346 = vweird.f32 %v1309
        %vm1347 = vweird.f32 %v1341
        %vm1348 = vmor %vm1346, %vm1347
        %v1349 = vsel %vm1348, %v1341, %v1345
        %v1350 = vand.u32 2147483647, %v1309
        %vm1351 = vcmp.eq.f32.partialorder %v1350, 8.507059e+37
        %v1352 = vand.u32 %v1309, 2147483648
        %v1353 = vor.u32 1.1754944e-38, %v1352
        %v1354 = vsel %vm1351, %v1353, %v1349
        %v1355 = vmul.f32 1.0, %v1354
        %v1356 = vrcp.pop %v1310
        %v1357 = vmul.f32 %v1310, %v1356
        %v1358 = vsub.f32 1.0, %v1357
        %v1359 = vmul.f32 %v1356, %v1358
        %v1360 = vadd.f32 %v1356, %v1359
        %vm1361 = vweird.f32 %v1310
        %vm1362 = vweird.f32 %v1356
        %vm1363 = vmor %vm1361, %vm1362
        %v1364 = vsel %vm1363, %v1356, %v1360
        %v1365 = vand.u32 2147483647, %v1310
        %vm1366 = vcmp.eq.f32.partialorder %v1365, 8.507059e+37
        %v1367 = vand.u32 %v1310, 2147483648
        %v1368 = vor.u32 1.1754944e-38, %v1367
        %v1369 = vsel %vm1366, %v1368, %v1364
        %v1370 = vmul.f32 1.0, %v1369
        %v1371 = vld [vmem:[#allocation5 + $0x30] sm:$0xff]
        %v1372 = vld [vmem:[#allocation5 + $0x38] sm:$0xff]
        %v1373 = vld [vmem:[#allocation5 + $0x40] sm:$0xff]
        %v1374 = vld [vmem:[#allocation5 + $0x48] sm:$0xff]
        %v1375 = vmul.f32 %v1325, %v1371
        %v1376 = vmul.f32 %v1340, %v1372
        %v1377 = vmul.f32 %v1355, %v1373
        %v1378 = vmul.f32 %v1370, %v1374
        %v1379 = vadd.f32 %v1375, %v1376
        %v1380 = vadd.f32 %v1379, %v1377
        %v1381 = vadd.f32 %v1380, %v1378
        %v1382 = vrot.slane %v1381, 4
        %v1383 = vadd.f32 %v1381, %v1382
        %v1384 = vrot.slane %v1383, 2
        %v1385 = vadd.f32 %v1383, %v1384
        %v1386 = vrot.slane %v1385, 1
        %v1387 = vadd.f32 %v1385, %v1386
        %v1388 = vsel %vm423, %v1387, -1e+30
        %1389 = vmax.xlane.f32.xlu0 %v1388
        %v1390 = vpop.xlane.xlu0 %1389
        %v1391 = vsub.f32 %v1388, %v1390
        %v1392 = vmul.f32 %v1391, 1.442695
        %v1393 = vpow.pop %v1392
        %1394 = vadd.xlane.f32.xlu0 %v1393
        %v1395 = vpop.xlane.xlu0 %1394
        %v1396 = vlog2.pop %v1395
        %v1397 = vmul.f32 %v1396, 0.6931472
        %v1398 = vsub.f32 %v1391, %v1397
        %1399 = vst [vmem:[%s180 + $0x4] sm:$0x1] %v1398
        %s1400 = scalar_lea.vmem %s154, 10 [#allocation2]
        %v1401 = vld [vmem:[%s1400] sm:$0x3]
        %v1402 = vperm.slane %v1401, 0
        %v1403 = vmul.f32 %v182, %v1402
        %v1404 = vmul.f32 %v183, %v1402
        %v1405 = vmul.f32 %v184, %v1402
        %v1406 = vmul.f32 %v185, %v1402
        %v1407 = vsel %vm197, %v1403, 0.0
        %1408 = vadd.xlane.f32.xlu0 %v1407
        %v1409 = vpop.xlane.xlu0 %1408
        %v1410 = vsel %vm197, %v1404, 0.0
        %1411 = vadd.xlane.f32.xlu0 %v1410
        %v1412 = vpop.xlane.xlu0 %1411
        %v1413 = vsel %vm197, %v1405, 0.0
        %1414 = vadd.xlane.f32.xlu0 %v1413
        %v1415 = vpop.xlane.xlu0 %1414
        %v1416 = vsel %vm197, %v1406, 0.0
        %1417 = vadd.xlane.f32.xlu0 %v1416
        %v1418 = vpop.xlane.xlu0 %1417
        %v1419 = vperm.slane %v1401, 1
        %v1420 = vmul.f32 %v182, %v1419
        %v1421 = vmul.f32 %v183, %v1419
        %v1422 = vmul.f32 %v184, %v1419
        %v1423 = vmul.f32 %v185, %v1419
        %v1424 = vsel %vm197, %v1420, 0.0
        %1425 = vadd.xlane.f32.xlu0 %v1424
        %v1426 = vpop.xlane.xlu0 %1425
        %v1427 = vsel %vm197, %v1421, 0.0
        %1428 = vadd.xlane.f32.xlu0 %v1427
        %v1429 = vpop.xlane.xlu0 %1428
        %v1430 = vsel %vm197, %v1422, 0.0
        %1431 = vadd.xlane.f32.xlu0 %v1430
        %v1432 = vpop.xlane.xlu0 %1431
        %v1433 = vsel %vm197, %v1423, 0.0
        %1434 = vadd.xlane.f32.xlu0 %v1433
        %v1435 = vpop.xlane.xlu0 %1434
        %v1436 = vmul.f32 %v1409, %v227
        %v1437 = vmul.f32 %v1412, %v227
        %v1438 = vmul.f32 %v1415, %v227
        %v1439 = vmul.f32 %v1418, %v227
        %v1440 = vmul.f32 %v1426, %v232
        %v1441 = vmul.f32 %v1429, %v232
        %v1442 = vmul.f32 %v1432, %v232
        %v1443 = vmul.f32 %v1435, %v232
        %v1444 = vadd.f32 %v1436, %v1440
        %v1445 = vadd.f32 %v1437, %v1441
        %v1446 = vadd.f32 %v1438, %v1442
        %v1447 = vadd.f32 %v1439, %v1443
        %v1448 = vxor.u32 %v1444, 2147483648
        %v1449 = vxor.u32 %v1445, 2147483648
        %v1450 = vxor.u32 %v1446, 2147483648
        %v1451 = vxor.u32 %v1447, 2147483648
        %v1452 = vmul.f32 %v1448, 1.442695
        %v1453 = vpow.pop %v1452
        %v1454 = vmul.f32 %v1449, 1.442695
        %v1455 = vpow.pop %v1454
        %v1456 = vmul.f32 %v1450, 1.442695
        %v1457 = vpow.pop %v1456
        %v1458 = vmul.f32 %v1451, 1.442695
        %v1459 = vpow.pop %v1458
        %v1460 = vadd.f32 %v1453, 1.0
        %v1461 = vadd.f32 %v1455, 1.0
        %v1462 = vadd.f32 %v1457, 1.0
        %v1463 = vadd.f32 %v1459, 1.0
        %v1464 = vrcp.pop %v1460
        %v1465 = vmul.f32 %v1460, %v1464
        %v1466 = vsub.f32 1.0, %v1465
        %v1467 = vmul.f32 %v1464, %v1466
        %v1468 = vadd.f32 %v1464, %v1467
        %vm1469 = vweird.f32 %v1460
        %vm1470 = vweird.f32 %v1464
        %vm1471 = vmor %vm1469, %vm1470
        %v1472 = vsel %vm1471, %v1464, %v1468
        %v1473 = vand.u32 2147483647, %v1460
        %vm1474 = vcmp.eq.f32.partialorder %v1473, 8.507059e+37
        %v1475 = vand.u32 %v1460, 2147483648
        %v1476 = vor.u32 1.1754944e-38, %v1475
        %v1477 = vsel %vm1474, %v1476, %v1472
        %v1478 = vmul.f32 1.0, %v1477
        %v1479 = vrcp.pop %v1461
        %v1480 = vmul.f32 %v1461, %v1479
        %v1481 = vsub.f32 1.0, %v1480
        %v1482 = vmul.f32 %v1479, %v1481
        %v1483 = vadd.f32 %v1479, %v1482
        %vm1484 = vweird.f32 %v1461
        %vm1485 = vweird.f32 %v1479
        %vm1486 = vmor %vm1484, %vm1485
        %v1487 = vsel %vm1486, %v1479, %v1483
        %v1488 = vand.u32 2147483647, %v1461
        %vm1489 = vcmp.eq.f32.partialorder %v1488, 8.507059e+37
        %v1490 = vand.u32 %v1461, 2147483648
        %v1491 = vor.u32 1.1754944e-38, %v1490
        %v1492 = vsel %vm1489, %v1491, %v1487
        %v1493 = vmul.f32 1.0, %v1492
        %v1494 = vrcp.pop %v1462
        %v1495 = vmul.f32 %v1462, %v1494
        %v1496 = vsub.f32 1.0, %v1495
        %v1497 = vmul.f32 %v1494, %v1496
        %v1498 = vadd.f32 %v1494, %v1497
        %vm1499 = vweird.f32 %v1462
        %vm1500 = vweird.f32 %v1494
        %vm1501 = vmor %vm1499, %vm1500
        %v1502 = vsel %vm1501, %v1494, %v1498
        %v1503 = vand.u32 2147483647, %v1462
        %vm1504 = vcmp.eq.f32.partialorder %v1503, 8.507059e+37
        %v1505 = vand.u32 %v1462, 2147483648
        %v1506 = vor.u32 1.1754944e-38, %v1505
        %v1507 = vsel %vm1504, %v1506, %v1502
        %v1508 = vmul.f32 1.0, %v1507
        %v1509 = vrcp.pop %v1463
        %v1510 = vmul.f32 %v1463, %v1509
        %v1511 = vsub.f32 1.0, %v1510
        %v1512 = vmul.f32 %v1509, %v1511
        %v1513 = vadd.f32 %v1509, %v1512
        %vm1514 = vweird.f32 %v1463
        %vm1515 = vweird.f32 %v1509
        %vm1516 = vmor %vm1514, %vm1515
        %v1517 = vsel %vm1516, %v1509, %v1513
        %v1518 = vand.u32 2147483647, %v1463
        %vm1519 = vcmp.eq.f32.partialorder %v1518, 8.507059e+37
        %v1520 = vand.u32 %v1463, 2147483648
        %v1521 = vor.u32 1.1754944e-38, %v1520
        %v1522 = vsel %vm1519, %v1521, %v1517
        %v1523 = vmul.f32 1.0, %v1522
        %v1524 = vmul.f32 %v1478, %v317
        %v1525 = vmul.f32 %v1493, %v317
        %v1526 = vmul.f32 %v1508, %v317
        %v1527 = vmul.f32 %v1523, %v317
        %1528 = vadd.xlane.f32.xlu0 %v1524
        %v1529 = vpop.xlane.xlu0 %1528
        %1530 = vadd.xlane.f32.xlu0 %v1525
        %v1531 = vpop.xlane.xlu0 %1530
        %1532 = vadd.xlane.f32.xlu0 %v1526
        %v1533 = vpop.xlane.xlu0 %1532
        %1534 = vadd.xlane.f32.xlu0 %v1527
        %v1535 = vpop.xlane.xlu0 %1534
        %v1536 = vxor.u32 %v1529, 2147483648
        %v1537 = vxor.u32 %v1531, 2147483648
        %v1538 = vxor.u32 %v1533, 2147483648
        %v1539 = vxor.u32 %v1535, 2147483648
        %v1540 = vmul.f32 %v1536, 1.442695
        %v1541 = vpow.pop %v1540
        %v1542 = vmul.f32 %v1537, 1.442695
        %v1543 = vpow.pop %v1542
        %v1544 = vmul.f32 %v1538, 1.442695
        %v1545 = vpow.pop %v1544
        %v1546 = vmul.f32 %v1539, 1.442695
        %v1547 = vpow.pop %v1546
        %v1548 = vadd.f32 %v1541, 1.0
        %v1549 = vadd.f32 %v1543, 1.0
        %v1550 = vadd.f32 %v1545, 1.0
        %v1551 = vadd.f32 %v1547, 1.0
        %v1552 = vrcp.pop %v1548
        %v1553 = vmul.f32 %v1548, %v1552
        %v1554 = vsub.f32 1.0, %v1553
        %v1555 = vmul.f32 %v1552, %v1554
        %v1556 = vadd.f32 %v1552, %v1555
        %vm1557 = vweird.f32 %v1548
        %vm1558 = vweird.f32 %v1552
        %vm1559 = vmor %vm1557, %vm1558
        %v1560 = vsel %vm1559, %v1552, %v1556
        %v1561 = vand.u32 2147483647, %v1548
        %vm1562 = vcmp.eq.f32.partialorder %v1561, 8.507059e+37
        %v1563 = vand.u32 %v1548, 2147483648
        %v1564 = vor.u32 1.1754944e-38, %v1563
        %v1565 = vsel %vm1562, %v1564, %v1560
        %v1566 = vmul.f32 1.0, %v1565
        %v1567 = vrcp.pop %v1549
        %v1568 = vmul.f32 %v1549, %v1567
        %v1569 = vsub.f32 1.0, %v1568
        %v1570 = vmul.f32 %v1567, %v1569
        %v1571 = vadd.f32 %v1567, %v1570
        %vm1572 = vweird.f32 %v1549
        %vm1573 = vweird.f32 %v1567
        %vm1574 = vmor %vm1572, %vm1573
        %v1575 = vsel %vm1574, %v1567, %v1571
        %v1576 = vand.u32 2147483647, %v1549
        %vm1577 = vcmp.eq.f32.partialorder %v1576, 8.507059e+37
        %v1578 = vand.u32 %v1549, 2147483648
        %v1579 = vor.u32 1.1754944e-38, %v1578
        %v1580 = vsel %vm1577, %v1579, %v1575
        %v1581 = vmul.f32 1.0, %v1580
        %v1582 = vrcp.pop %v1550
        %v1583 = vmul.f32 %v1550, %v1582
        %v1584 = vsub.f32 1.0, %v1583
        %v1585 = vmul.f32 %v1582, %v1584
        %v1586 = vadd.f32 %v1582, %v1585
        %vm1587 = vweird.f32 %v1550
        %vm1588 = vweird.f32 %v1582
        %vm1589 = vmor %vm1587, %vm1588
        %v1590 = vsel %vm1589, %v1582, %v1586
        %v1591 = vand.u32 2147483647, %v1550
        %vm1592 = vcmp.eq.f32.partialorder %v1591, 8.507059e+37
        %v1593 = vand.u32 %v1550, 2147483648
        %v1594 = vor.u32 1.1754944e-38, %v1593
        %v1595 = vsel %vm1592, %v1594, %v1590
        %v1596 = vmul.f32 1.0, %v1595
        %v1597 = vrcp.pop %v1551
        %v1598 = vmul.f32 %v1551, %v1597
        %v1599 = vsub.f32 1.0, %v1598
        %v1600 = vmul.f32 %v1597, %v1599
        %v1601 = vadd.f32 %v1597, %v1600
        %vm1602 = vweird.f32 %v1551
        %vm1603 = vweird.f32 %v1597
        %vm1604 = vmor %vm1602, %vm1603
        %v1605 = vsel %vm1604, %v1597, %v1601
        %v1606 = vand.u32 2147483647, %v1551
        %vm1607 = vcmp.eq.f32.partialorder %v1606, 8.507059e+37
        %v1608 = vand.u32 %v1551, 2147483648
        %v1609 = vor.u32 1.1754944e-38, %v1608
        %v1610 = vsel %vm1607, %v1609, %v1605
        %v1611 = vmul.f32 1.0, %v1610
        %v1612 = vld [vmem:[#allocation5 + $0x30] sm:$0xff]
        %v1613 = vld [vmem:[#allocation5 + $0x38] sm:$0xff]
        %v1614 = vld [vmem:[#allocation5 + $0x40] sm:$0xff]
        %v1615 = vld [vmem:[#allocation5 + $0x48] sm:$0xff]
        %v1616 = vmul.f32 %v1566, %v1612
        %v1617 = vmul.f32 %v1581, %v1613
        %v1618 = vmul.f32 %v1596, %v1614
        %v1619 = vmul.f32 %v1611, %v1615
        %v1620 = vadd.f32 %v1616, %v1617
        %v1621 = vadd.f32 %v1620, %v1618
        %v1622 = vadd.f32 %v1621, %v1619
        %v1623 = vrot.slane %v1622, 4
        %v1624 = vadd.f32 %v1622, %v1623
        %v1625 = vrot.slane %v1624, 2
        %v1626 = vadd.f32 %v1624, %v1625
        %v1627 = vrot.slane %v1626, 1
        %v1628 = vadd.f32 %v1626, %v1627
        %v1629 = vsel %vm423, %v1628, -1e+30
        %1630 = vmax.xlane.f32.xlu0 %v1629
        %v1631 = vpop.xlane.xlu0 %1630
        %v1632 = vsub.f32 %v1629, %v1631
        %v1633 = vmul.f32 %v1632, 1.442695
        %v1634 = vpow.pop %v1633
        %1635 = vadd.xlane.f32.xlu0 %v1634
        %v1636 = vpop.xlane.xlu0 %1635
        %v1637 = vlog2.pop %v1636
        %v1638 = vmul.f32 %v1637, 0.6931472
        %v1639 = vsub.f32 %v1632, %v1638
        %1640 = vst [vmem:[%s180 + $0x5] sm:$0x1] %v1639
        %s1641 = scalar_lea.vmem %s154, 12 [#allocation2]
        %v1642 = vld [vmem:[%s1641] sm:$0x3]
        %v1643 = vperm.slane %v1642, 0
        %v1644 = vmul.f32 %v182, %v1643
        %v1645 = vmul.f32 %v183, %v1643
        %v1646 = vmul.f32 %v184, %v1643
        %v1647 = vmul.f32 %v185, %v1643
        %v1648 = vsel %vm197, %v1644, 0.0
        %1649 = vadd.xlane.f32.xlu0 %v1648
        %v1650 = vpop.xlane.xlu0 %1649
        %v1651 = vsel %vm197, %v1645, 0.0
        %1652 = vadd.xlane.f32.xlu0 %v1651
        %v1653 = vpop.xlane.xlu0 %1652
        %v1654 = vsel %vm197, %v1646, 0.0
        %1655 = vadd.xlane.f32.xlu0 %v1654
        %v1656 = vpop.xlane.xlu0 %1655
        %v1657 = vsel %vm197, %v1647, 0.0
        %1658 = vadd.xlane.f32.xlu0 %v1657
        %v1659 = vpop.xlane.xlu0 %1658
        %v1660 = vperm.slane %v1642, 1
        %v1661 = vmul.f32 %v182, %v1660
        %v1662 = vmul.f32 %v183, %v1660
        %v1663 = vmul.f32 %v184, %v1660
        %v1664 = vmul.f32 %v185, %v1660
        %v1665 = vsel %vm197, %v1661, 0.0
        %1666 = vadd.xlane.f32.xlu0 %v1665
        %v1667 = vpop.xlane.xlu0 %1666
        %v1668 = vsel %vm197, %v1662, 0.0
        %1669 = vadd.xlane.f32.xlu0 %v1668
        %v1670 = vpop.xlane.xlu0 %1669
        %v1671 = vsel %vm197, %v1663, 0.0
        %1672 = vadd.xlane.f32.xlu0 %v1671
        %v1673 = vpop.xlane.xlu0 %1672
        %v1674 = vsel %vm197, %v1664, 0.0
        %1675 = vadd.xlane.f32.xlu0 %v1674
        %v1676 = vpop.xlane.xlu0 %1675
        %v1677 = vmul.f32 %v1650, %v227
        %v1678 = vmul.f32 %v1653, %v227
        %v1679 = vmul.f32 %v1656, %v227
        %v1680 = vmul.f32 %v1659, %v227
        %v1681 = vmul.f32 %v1667, %v232
        %v1682 = vmul.f32 %v1670, %v232
        %v1683 = vmul.f32 %v1673, %v232
        %v1684 = vmul.f32 %v1676, %v232
        %v1685 = vadd.f32 %v1677, %v1681
        %v1686 = vadd.f32 %v1678, %v1682
        %v1687 = vadd.f32 %v1679, %v1683
        %v1688 = vadd.f32 %v1680, %v1684
        %v1689 = vxor.u32 %v1685, 2147483648
        %v1690 = vxor.u32 %v1686, 2147483648
        %v1691 = vxor.u32 %v1687, 2147483648
        %v1692 = vxor.u32 %v1688, 2147483648
        %v1693 = vmul.f32 %v1689, 1.442695
        %v1694 = vpow.pop %v1693
        %v1695 = vmul.f32 %v1690, 1.442695
        %v1696 = vpow.pop %v1695
        %v1697 = vmul.f32 %v1691, 1.442695
        %v1698 = vpow.pop %v1697
        %v1699 = vmul.f32 %v1692, 1.442695
        %v1700 = vpow.pop %v1699
        %v1701 = vadd.f32 %v1694, 1.0
        %v1702 = vadd.f32 %v1696, 1.0
        %v1703 = vadd.f32 %v1698, 1.0
        %v1704 = vadd.f32 %v1700, 1.0
        %v1705 = vrcp.pop %v1701
        %v1706 = vmul.f32 %v1701, %v1705
        %v1707 = vsub.f32 1.0, %v1706
        %v1708 = vmul.f32 %v1705, %v1707
        %v1709 = vadd.f32 %v1705, %v1708
        %vm1710 = vweird.f32 %v1701
        %vm1711 = vweird.f32 %v1705
        %vm1712 = vmor %vm1710, %vm1711
        %v1713 = vsel %vm1712, %v1705, %v1709
        %v1714 = vand.u32 2147483647, %v1701
        %vm1715 = vcmp.eq.f32.partialorder %v1714, 8.507059e+37
        %v1716 = vand.u32 %v1701, 2147483648
        %v1717 = vor.u32 1.1754944e-38, %v1716
        %v1718 = vsel %vm1715, %v1717, %v1713
        %v1719 = vmul.f32 1.0, %v1718
        %v1720 = vrcp.pop %v1702
        %v1721 = vmul.f32 %v1702, %v1720
        %v1722 = vsub.f32 1.0, %v1721
        %v1723 = vmul.f32 %v1720, %v1722
        %v1724 = vadd.f32 %v1720, %v1723
        %vm1725 = vweird.f32 %v1702
        %vm1726 = vweird.f32 %v1720
        %vm1727 = vmor %vm1725, %vm1726
        %v1728 = vsel %vm1727, %v1720, %v1724
        %v1729 = vand.u32 2147483647, %v1702
        %vm1730 = vcmp.eq.f32.partialorder %v1729, 8.507059e+37
        %v1731 = vand.u32 %v1702, 2147483648
        %v1732 = vor.u32 1.1754944e-38, %v1731
        %v1733 = vsel %vm1730, %v1732, %v1728
        %v1734 = vmul.f32 1.0, %v1733
        %v1735 = vrcp.pop %v1703
        %v1736 = vmul.f32 %v1703, %v1735
        %v1737 = vsub.f32 1.0, %v1736
        %v1738 = vmul.f32 %v1735, %v1737
        %v1739 = vadd.f32 %v1735, %v1738
        %vm1740 = vweird.f32 %v1703
        %vm1741 = vweird.f32 %v1735
        %vm1742 = vmor %vm1740, %vm1741
        %v1743 = vsel %vm1742, %v1735, %v1739
        %v1744 = vand.u32 2147483647, %v1703
        %vm1745 = vcmp.eq.f32.partialorder %v1744, 8.507059e+37
        %v1746 = vand.u32 %v1703, 2147483648
        %v1747 = vor.u32 1.1754944e-38, %v1746
        %v1748 = vsel %vm1745, %v1747, %v1743
        %v1749 = vmul.f32 1.0, %v1748
        %v1750 = vrcp.pop %v1704
        %v1751 = vmul.f32 %v1704, %v1750
        %v1752 = vsub.f32 1.0, %v1751
        %v1753 = vmul.f32 %v1750, %v1752
        %v1754 = vadd.f32 %v1750, %v1753
        %vm1755 = vweird.f32 %v1704
        %vm1756 = vweird.f32 %v1750
        %vm1757 = vmor %vm1755, %vm1756
        %v1758 = vsel %vm1757, %v1750, %v1754
        %v1759 = vand.u32 2147483647, %v1704
        %vm1760 = vcmp.eq.f32.partialorder %v1759, 8.507059e+37
        %v1761 = vand.u32 %v1704, 2147483648
        %v1762 = vor.u32 1.1754944e-38, %v1761
        %v1763 = vsel %vm1760, %v1762, %v1758
        %v1764 = vmul.f32 1.0, %v1763
        %v1765 = vmul.f32 %v1719, %v317
        %v1766 = vmul.f32 %v1734, %v317
        %v1767 = vmul.f32 %v1749, %v317
        %v1768 = vmul.f32 %v1764, %v317
        %1769 = vadd.xlane.f32.xlu0 %v1765
        %v1770 = vpop.xlane.xlu0 %1769
        %1771 = vadd.xlane.f32.xlu0 %v1766
        %v1772 = vpop.xlane.xlu0 %1771
        %1773 = vadd.xlane.f32.xlu0 %v1767
        %v1774 = vpop.xlane.xlu0 %1773
        %1775 = vadd.xlane.f32.xlu0 %v1768
        %v1776 = vpop.xlane.xlu0 %1775
        %v1777 = vxor.u32 %v1770, 2147483648
        %v1778 = vxor.u32 %v1772, 2147483648
        %v1779 = vxor.u32 %v1774, 2147483648
        %v1780 = vxor.u32 %v1776, 2147483648
        %v1781 = vmul.f32 %v1777, 1.442695
        %v1782 = vpow.pop %v1781
        %v1783 = vmul.f32 %v1778, 1.442695
        %v1784 = vpow.pop %v1783
        %v1785 = vmul.f32 %v1779, 1.442695
        %v1786 = vpow.pop %v1785
        %v1787 = vmul.f32 %v1780, 1.442695
        %v1788 = vpow.pop %v1787
        %v1789 = vadd.f32 %v1782, 1.0
        %v1790 = vadd.f32 %v1784, 1.0
        %v1791 = vadd.f32 %v1786, 1.0
        %v1792 = vadd.f32 %v1788, 1.0
        %v1793 = vrcp.pop %v1789
        %v1794 = vmul.f32 %v1789, %v1793
        %v1795 = vsub.f32 1.0, %v1794
        %v1796 = vmul.f32 %v1793, %v1795
        %v1797 = vadd.f32 %v1793, %v1796
        %vm1798 = vweird.f32 %v1789
        %vm1799 = vweird.f32 %v1793
        %vm1800 = vmor %vm1798, %vm1799
        %v1801 = vsel %vm1800, %v1793, %v1797
        %v1802 = vand.u32 2147483647, %v1789
        %vm1803 = vcmp.eq.f32.partialorder %v1802, 8.507059e+37
        %v1804 = vand.u32 %v1789, 2147483648
        %v1805 = vor.u32 1.1754944e-38, %v1804
        %v1806 = vsel %vm1803, %v1805, %v1801
        %v1807 = vmul.f32 1.0, %v1806
        %v1808 = vrcp.pop %v1790
        %v1809 = vmul.f32 %v1790, %v1808
        %v1810 = vsub.f32 1.0, %v1809
        %v1811 = vmul.f32 %v1808, %v1810
        %v1812 = vadd.f32 %v1808, %v1811
        %vm1813 = vweird.f32 %v1790
        %vm1814 = vweird.f32 %v1808
        %vm1815 = vmor %vm1813, %vm1814
        %v1816 = vsel %vm1815, %v1808, %v1812
        %v1817 = vand.u32 2147483647, %v1790
        %vm1818 = vcmp.eq.f32.partialorder %v1817, 8.507059e+37
        %v1819 = vand.u32 %v1790, 2147483648
        %v1820 = vor.u32 1.1754944e-38, %v1819
        %v1821 = vsel %vm1818, %v1820, %v1816
        %v1822 = vmul.f32 1.0, %v1821
        %v1823 = vrcp.pop %v1791
        %v1824 = vmul.f32 %v1791, %v1823
        %v1825 = vsub.f32 1.0, %v1824
        %v1826 = vmul.f32 %v1823, %v1825
        %v1827 = vadd.f32 %v1823, %v1826
        %vm1828 = vweird.f32 %v1791
        %vm1829 = vweird.f32 %v1823
        %vm1830 = vmor %vm1828, %vm1829
        %v1831 = vsel %vm1830, %v1823, %v1827
        %v1832 = vand.u32 2147483647, %v1791
        %vm1833 = vcmp.eq.f32.partialorder %v1832, 8.507059e+37
        %v1834 = vand.u32 %v1791, 2147483648
        %v1835 = vor.u32 1.1754944e-38, %v1834
        %v1836 = vsel %vm1833, %v1835, %v1831
        %v1837 = vmul.f32 1.0, %v1836
        %v1838 = vrcp.pop %v1792
        %v1839 = vmul.f32 %v1792, %v1838
        %v1840 = vsub.f32 1.0, %v1839
        %v1841 = vmul.f32 %v1838, %v1840
        %v1842 = vadd.f32 %v1838, %v1841
        %vm1843 = vweird.f32 %v1792
        %vm1844 = vweird.f32 %v1838
        %vm1845 = vmor %vm1843, %vm1844
        %v1846 = vsel %vm1845, %v1838, %v1842
        %v1847 = vand.u32 2147483647, %v1792
        %vm1848 = vcmp.eq.f32.partialorder %v1847, 8.507059e+37
        %v1849 = vand.u32 %v1792, 2147483648
        %v1850 = vor.u32 1.1754944e-38, %v1849
        %v1851 = vsel %vm1848, %v1850, %v1846
        %v1852 = vmul.f32 1.0, %v1851
        %v1853 = vld [vmem:[#allocation5 + $0x30] sm:$0xff]
        %v1854 = vld [vmem:[#allocation5 + $0x38] sm:$0xff]
        %v1855 = vld [vmem:[#allocation5 + $0x40] sm:$0xff]
        %v1856 = vld [vmem:[#allocation5 + $0x48] sm:$0xff]
        %v1857 = vmul.f32 %v1807, %v1853
        %v1858 = vmul.f32 %v1822, %v1854
        %v1859 = vmul.f32 %v1837, %v1855
        %v1860 = vmul.f32 %v1852, %v1856
        %v1861 = vadd.f32 %v1857, %v1858
        %v1862 = vadd.f32 %v1861, %v1859
        %v1863 = vadd.f32 %v1862, %v1860
        %v1864 = vrot.slane %v1863, 4
        %v1865 = vadd.f32 %v1863, %v1864
        %v1866 = vrot.slane %v1865, 2
        %v1867 = vadd.f32 %v1865, %v1866
        %v1868 = vrot.slane %v1867, 1
        %v1869 = vadd.f32 %v1867, %v1868
        %v1870 = vsel %vm423, %v1869, -1e+30
        %1871 = vmax.xlane.f32.xlu0 %v1870
        %v1872 = vpop.xlane.xlu0 %1871
        %v1873 = vsub.f32 %v1870, %v1872
        %v1874 = vmul.f32 %v1873, 1.442695
        %v1875 = vpow.pop %v1874
        %1876 = vadd.xlane.f32.xlu0 %v1875
        %v1877 = vpop.xlane.xlu0 %1876
        %v1878 = vlog2.pop %v1877
        %v1879 = vmul.f32 %v1878, 0.6931472
        %v1880 = vsub.f32 %v1873, %v1879
        %1881 = vst [vmem:[%s180 + $0x6] sm:$0x1] %v1880
        %s1882 = scalar_lea.vmem %s154, 14 [#allocation2]
        %v1883 = vld [vmem:[%s1882] sm:$0x3]
        %v1884 = vperm.slane %v1883, 0
        %v1885 = vmul.f32 %v182, %v1884
        %v1886 = vmul.f32 %v183, %v1884
        %v1887 = vmul.f32 %v184, %v1884
        %v1888 = vmul.f32 %v185, %v1884
        %v1889 = vsel %vm197, %v1885, 0.0
        %1890 = vadd.xlane.f32.xlu0 %v1889
        %v1891 = vpop.xlane.xlu0 %1890
        %v1892 = vsel %vm197, %v1886, 0.0
        %1893 = vadd.xlane.f32.xlu0 %v1892
        %v1894 = vpop.xlane.xlu0 %1893
        %v1895 = vsel %vm197, %v1887, 0.0
        %1896 = vadd.xlane.f32.xlu0 %v1895
        %v1897 = vpop.xlane.xlu0 %1896
        %v1898 = vsel %vm197, %v1888, 0.0
        %1899 = vadd.xlane.f32.xlu0 %v1898
        %v1900 = vpop.xlane.xlu0 %1899
        %v1901 = vperm.slane %v1883, 1
        %v1902 = vmul.f32 %v182, %v1901
        %v1903 = vmul.f32 %v183, %v1901
        %v1904 = vmul.f32 %v184, %v1901
        %v1905 = vmul.f32 %v185, %v1901
        %v1906 = vsel %vm197, %v1902, 0.0
        %1907 = vadd.xlane.f32.xlu0 %v1906
        %v1908 = vpop.xlane.xlu0 %1907
        %v1909 = vsel %vm197, %v1903, 0.0
        %1910 = vadd.xlane.f32.xlu0 %v1909
        %v1911 = vpop.xlane.xlu0 %1910
        %v1912 = vsel %vm197, %v1904, 0.0
        %1913 = vadd.xlane.f32.xlu0 %v1912
        %v1914 = vpop.xlane.xlu0 %1913
        %v1915 = vsel %vm197, %v1905, 0.0
        %1916 = vadd.xlane.f32.xlu0 %v1915
        %v1917 = vpop.xlane.xlu0 %1916
        %v1918 = vmul.f32 %v1891, %v227
        %v1919 = vmul.f32 %v1894, %v227
        %v1920 = vmul.f32 %v1897, %v227
        %v1921 = vmul.f32 %v1900, %v227
        %v1922 = vmul.f32 %v1908, %v232
        %v1923 = vmul.f32 %v1911, %v232
        %v1924 = vmul.f32 %v1914, %v232
        %v1925 = vmul.f32 %v1917, %v232
        %v1926 = vadd.f32 %v1918, %v1922
        %v1927 = vadd.f32 %v1919, %v1923
        %v1928 = vadd.f32 %v1920, %v1924
        %v1929 = vadd.f32 %v1921, %v1925
        %v1930 = vxor.u32 %v1926, 2147483648
        %v1931 = vxor.u32 %v1927, 2147483648
        %v1932 = vxor.u32 %v1928, 2147483648
        %v1933 = vxor.u32 %v1929, 2147483648
        %v1934 = vmul.f32 %v1930, 1.442695
        %v1935 = vpow.pop %v1934
        %v1936 = vmul.f32 %v1931, 1.442695
        %v1937 = vpow.pop %v1936
        %v1938 = vmul.f32 %v1932, 1.442695
        %v1939 = vpow.pop %v1938
        %v1940 = vmul.f32 %v1933, 1.442695
        %v1941 = vpow.pop %v1940
        %v1942 = vadd.f32 %v1935, 1.0
        %v1943 = vadd.f32 %v1937, 1.0
        %v1944 = vadd.f32 %v1939, 1.0
        %v1945 = vadd.f32 %v1941, 1.0
        %v1946 = vrcp.pop %v1942
        %v1947 = vmul.f32 %v1942, %v1946
        %v1948 = vsub.f32 1.0, %v1947
        %v1949 = vmul.f32 %v1946, %v1948
        %v1950 = vadd.f32 %v1946, %v1949
        %vm1951 = vweird.f32 %v1942
        %vm1952 = vweird.f32 %v1946
        %vm1953 = vmor %vm1951, %vm1952
        %v1954 = vsel %vm1953, %v1946, %v1950
        %v1955 = vand.u32 2147483647, %v1942
        %vm1956 = vcmp.eq.f32.partialorder %v1955, 8.507059e+37
        %v1957 = vand.u32 %v1942, 2147483648
        %v1958 = vor.u32 1.1754944e-38, %v1957
        %v1959 = vsel %vm1956, %v1958, %v1954
        %v1960 = vmul.f32 1.0, %v1959
        %v1961 = vrcp.pop %v1943
        %v1962 = vmul.f32 %v1943, %v1961
        %v1963 = vsub.f32 1.0, %v1962
        %v1964 = vmul.f32 %v1961, %v1963
        %v1965 = vadd.f32 %v1961, %v1964
        %vm1966 = vweird.f32 %v1943
        %vm1967 = vweird.f32 %v1961
        %vm1968 = vmor %vm1966, %vm1967
        %v1969 = vsel %vm1968, %v1961, %v1965
        %v1970 = vand.u32 2147483647, %v1943
        %vm1971 = vcmp.eq.f32.partialorder %v1970, 8.507059e+37
        %v1972 = vand.u32 %v1943, 2147483648
        %v1973 = vor.u32 1.1754944e-38, %v1972
        %v1974 = vsel %vm1971, %v1973, %v1969
        %v1975 = vmul.f32 1.0, %v1974
        %v1976 = vrcp.pop %v1944
        %v1977 = vmul.f32 %v1944, %v1976
        %v1978 = vsub.f32 1.0, %v1977
        %v1979 = vmul.f32 %v1976, %v1978
        %v1980 = vadd.f32 %v1976, %v1979
        %vm1981 = vweird.f32 %v1944
        %vm1982 = vweird.f32 %v1976
        %vm1983 = vmor %vm1981, %vm1982
        %v1984 = vsel %vm1983, %v1976, %v1980
        %v1985 = vand.u32 2147483647, %v1944
        %vm1986 = vcmp.eq.f32.partialorder %v1985, 8.507059e+37
        %v1987 = vand.u32 %v1944, 2147483648
        %v1988 = vor.u32 1.1754944e-38, %v1987
        %v1989 = vsel %vm1986, %v1988, %v1984
        %v1990 = vmul.f32 1.0, %v1989
        %v1991 = vrcp.pop %v1945
        %v1992 = vmul.f32 %v1945, %v1991
        %v1993 = vsub.f32 1.0, %v1992
        %v1994 = vmul.f32 %v1991, %v1993
        %v1995 = vadd.f32 %v1991, %v1994
        %vm1996 = vweird.f32 %v1945
        %vm1997 = vweird.f32 %v1991
        %vm1998 = vmor %vm1996, %vm1997
        %v1999 = vsel %vm1998, %v1991, %v1995
        %v2000 = vand.u32 2147483647, %v1945
        %vm2001 = vcmp.eq.f32.partialorder %v2000, 8.507059e+37
        %v2002 = vand.u32 %v1945, 2147483648
        %v2003 = vor.u32 1.1754944e-38, %v2002
        %v2004 = vsel %vm2001, %v2003, %v1999
        %v2005 = vmul.f32 1.0, %v2004
        %v2006 = vmul.f32 %v1960, %v317
        %v2007 = vmul.f32 %v1975, %v317
        %v2008 = vmul.f32 %v1990, %v317
        %v2009 = vmul.f32 %v2005, %v317
        %2010 = vadd.xlane.f32.xlu0 %v2006
        %v2011 = vpop.xlane.xlu0 %2010
        %2012 = vadd.xlane.f32.xlu0 %v2007
        %v2013 = vpop.xlane.xlu0 %2012
        %2014 = vadd.xlane.f32.xlu0 %v2008
        %v2015 = vpop.xlane.xlu0 %2014
        %2016 = vadd.xlane.f32.xlu0 %v2009
        %v2017 = vpop.xlane.xlu0 %2016
        %v2018 = vxor.u32 %v2011, 2147483648
        %v2019 = vxor.u32 %v2013, 2147483648
        %v2020 = vxor.u32 %v2015, 2147483648
        %v2021 = vxor.u32 %v2017, 2147483648
        %v2022 = vmul.f32 %v2018, 1.442695
        %v2023 = vpow.pop %v2022
        %v2024 = vmul.f32 %v2019, 1.442695
        %v2025 = vpow.pop %v2024
        %v2026 = vmul.f32 %v2020, 1.442695
        %v2027 = vpow.pop %v2026
        %v2028 = vmul.f32 %v2021, 1.442695
        %v2029 = vpow.pop %v2028
        %v2030 = vadd.f32 %v2023, 1.0
        %v2031 = vadd.f32 %v2025, 1.0
        %v2032 = vadd.f32 %v2027, 1.0
        %v2033 = vadd.f32 %v2029, 1.0
        %v2034 = vrcp.pop %v2030
        %v2035 = vmul.f32 %v2030, %v2034
        %v2036 = vsub.f32 1.0, %v2035
        %v2037 = vmul.f32 %v2034, %v2036
        %v2038 = vadd.f32 %v2034, %v2037
        %vm2039 = vweird.f32 %v2030
        %vm2040 = vweird.f32 %v2034
        %vm2041 = vmor %vm2039, %vm2040
        %v2042 = vsel %vm2041, %v2034, %v2038
        %v2043 = vand.u32 2147483647, %v2030
        %vm2044 = vcmp.eq.f32.partialorder %v2043, 8.507059e+37
        %v2045 = vand.u32 %v2030, 2147483648
        %v2046 = vor.u32 1.1754944e-38, %v2045
        %v2047 = vsel %vm2044, %v2046, %v2042
        %v2048 = vmul.f32 1.0, %v2047
        %v2049 = vrcp.pop %v2031
        %v2050 = vmul.f32 %v2031, %v2049
        %v2051 = vsub.f32 1.0, %v2050
        %v2052 = vmul.f32 %v2049, %v2051
        %v2053 = vadd.f32 %v2049, %v2052
        %vm2054 = vweird.f32 %v2031
        %vm2055 = vweird.f32 %v2049
        %vm2056 = vmor %vm2054, %vm2055
        %v2057 = vsel %vm2056, %v2049, %v2053
        %v2058 = vand.u32 2147483647, %v2031
        %vm2059 = vcmp.eq.f32.partialorder %v2058, 8.507059e+37
        %v2060 = vand.u32 %v2031, 2147483648
        %v2061 = vor.u32 1.1754944e-38, %v2060
        %v2062 = vsel %vm2059, %v2061, %v2057
        %v2063 = vmul.f32 1.0, %v2062
        %v2064 = vrcp.pop %v2032
        %v2065 = vmul.f32 %v2032, %v2064
        %v2066 = vsub.f32 1.0, %v2065
        %v2067 = vmul.f32 %v2064, %v2066
        %v2068 = vadd.f32 %v2064, %v2067
        %vm2069 = vweird.f32 %v2032
        %vm2070 = vweird.f32 %v2064
        %vm2071 = vmor %vm2069, %vm2070
        %v2072 = vsel %vm2071, %v2064, %v2068
        %v2073 = vand.u32 2147483647, %v2032
        %vm2074 = vcmp.eq.f32.partialorder %v2073, 8.507059e+37
        %v2075 = vand.u32 %v2032, 2147483648
        %v2076 = vor.u32 1.1754944e-38, %v2075
        %v2077 = vsel %vm2074, %v2076, %v2072
        %v2078 = vmul.f32 1.0, %v2077
        %v2079 = vrcp.pop %v2033
        %v2080 = vmul.f32 %v2033, %v2079
        %v2081 = vsub.f32 1.0, %v2080
        %v2082 = vmul.f32 %v2079, %v2081
        %v2083 = vadd.f32 %v2079, %v2082
        %vm2084 = vweird.f32 %v2033
        %vm2085 = vweird.f32 %v2079
        %vm2086 = vmor %vm2084, %vm2085
        %v2087 = vsel %vm2086, %v2079, %v2083
        %v2088 = vand.u32 2147483647, %v2033
        %vm2089 = vcmp.eq.f32.partialorder %v2088, 8.507059e+37
        %v2090 = vand.u32 %v2033, 2147483648
        %v2091 = vor.u32 1.1754944e-38, %v2090
        %v2092 = vsel %vm2089, %v2091, %v2087
        %v2093 = vmul.f32 1.0, %v2092
        %v2094 = vld [vmem:[#allocation5 + $0x30] sm:$0xff]
        %v2095 = vld [vmem:[#allocation5 + $0x38] sm:$0xff]
        %v2096 = vld [vmem:[#allocation5 + $0x40] sm:$0xff]
        %v2097 = vld [vmem:[#allocation5 + $0x48] sm:$0xff]
        %v2098 = vmul.f32 %v2048, %v2094
        %v2099 = vmul.f32 %v2063, %v2095
        %v2100 = vmul.f32 %v2078, %v2096
        %v2101 = vmul.f32 %v2093, %v2097
        %v2102 = vadd.f32 %v2098, %v2099
        %v2103 = vadd.f32 %v2102, %v2100
        %v2104 = vadd.f32 %v2103, %v2101
        %v2105 = vrot.slane %v2104, 4
        %v2106 = vadd.f32 %v2104, %v2105
        %v2107 = vrot.slane %v2106, 2
        %v2108 = vadd.f32 %v2106, %v2107
        %v2109 = vrot.slane %v2108, 1
        %v2110 = vadd.f32 %v2108, %v2109
        %v2111 = vsel %vm423, %v2110, -1e+30
        %2112 = vmax.xlane.f32.xlu0 %v2111
        %v2113 = vpop.xlane.xlu0 %2112
        %v2114 = vsub.f32 %v2111, %v2113
        %v2115 = vmul.f32 %v2114, 1.442695
        %v2116 = vpow.pop %v2115
        %2117 = vadd.xlane.f32.xlu0 %v2116
        %v2118 = vpop.xlane.xlu0 %2117
        %v2119 = vlog2.pop %v2118
        %v2120 = vmul.f32 %v2119, 0.6931472
        %v2121 = vsub.f32 %v2114, %v2120
        %2122 = vst [vmem:[%s180 + $0x7] sm:$0x1] %v2121
        %s2123 = sand.u32 %s75, 1
        %s2124 = scalar_lea.sflag [#allocation4], %s2123
        %s2125 = sand.u32 %s75, 1
        %s2126 = smul.addr %s2125, 8
        %s2127 = scalar_lea.vmem [#allocation7], %s2126
        // Predicated region
        $region37: #{informed_sender_forward.1} parent=27 // pred_check
          %p2128 = pneg %p85
        $region38: #{informed_sender_forward.1} parent=27 // pred_check_branch
          %2130 = sbr.rel (%p2128) target = $region40
        $region39: #{informed_sender_forward.1} parent=27 // pred_region
          %2132 = vsyncadd %s2124, 0
          %s2133 = smul.addr %s20, 8
          %s2134 = scalar_lea.hbm %s2, %s2133
          %s2136 = sshll.u32 %s2127, 4
          %s2137 = int_to_ptr.vmem [resolvable:$true] %s2136
          %s2138 = sshll.u32 %s2134, 4
          %s2139 = int_to_ptr.hbm [resolvable:$true] %s2138
          %2141 = dma.vmem_to_hbm [thread:$0]  %s2137, 128, %s2139, %s2124
        $region40: #{informed_sender_forward.1} parent=27 // pred_fallthru
          _
      $region28: #{informed_sender_forward.1} parent=5 // pred_fallthru
        _
      %p2142 = scmp.le.s32.totalorder 2, %s15
      // Predicated region
      $region41: #{informed_sender_forward.1} parent=5 // pred_check
        %p2143 = pneg %p2142
      $region42: #{informed_sender_forward.1} parent=5 // pred_check_branch
        %2145 = sbr.rel (%p2143) target = $region44
      $region43: #{informed_sender_forward.1} parent=5 // pred_region
        %s2146 = ssub.s32 %s15, 2
        // Predicated region
        $region45: #{informed_sender_forward.1} parent=43 // pred_check
          %p2147 = pneg %p91
        $region46: #{informed_sender_forward.1} parent=43 // pred_check_branch
          %2149 = sbr.rel (%p2147) target = $region48
        $region47: #{informed_sender_forward.1} parent=43 // pred_region
          %s2150 = sand.u32 %s76, 1
          %s2151 = scalar_lea.sflag [#allocation4], %s2150
          %s2152 = sand.u32 %s76, 1
          %s2153 = smul.addr %s2152, 8
          %s2154 = scalar_lea.vmem [#allocation7], %s2153
          %2156 = dma.done %s2151, 128
        $region48: #{informed_sender_forward.1} parent=43 // pred_fallthru
          _
      $region44: #{informed_sender_forward.1} parent=5 // pred_fallthru
        _
    $region6: #{informed_sender_forward.1} parent=1 // loop_footer
      %s19 = sadd.s32 1, %s15
    $region7: #{informed_sender_forward.1} parent=1 // loop_footer_branch
      %14 = sbr.rel target = $region3
    $region8: #{informed_sender_forward.1} parent=1 // loop_exit
      _
    %2157 = vsyncpa [#allocation3], 1
    %s2158 = scalar_lea.sflag [#allocation3], 1
    %2159 = vsyncpa %s2158, 1
    %2160 = vsyncpa [#allocation6], 1
    %2161 = vsyncpa [#allocation4], 1
    %s2162 = scalar_lea.sflag [#allocation4], 1
    %2163 = vsyncpa %s2162, 1

</llo_original>
